<compile_context>
chip_gen: v6e
topology: v6e:2x2x1
jax: 0.10.0
libtpu: 0.0.40
codegen_flags: <defaults>
</compile_context>

<pallas_src>
import functools

import jax
import jax.numpy as jnp
from jax import lax
from jax.experimental import pallas as pl
from jax.experimental.pallas import tpu as pltpu

# ---- synthetic hyperparameters (stand-ins for hp.pitch_size / hp.encoder_dim) ----
N_PITCH = 64          # hp.pitch_size
D_MODEL = 32          # hp.encoder_dim
PAD_IDX = 0           # Constants.PAD
KSIZE   = 5
PADL    = (KSIZE - 1) // 2
REF_DIM = 10          # output of ref_emb_to_pitch_emb
MID_DIM = 64          # hidden of ref_emb_to_pitch_emb
CAT_DIM = D_MODEL + REF_DIM


def _note_encoder_kernel(T, bblk,
                         pitch_ref, r10_ref, table_ref,
                         wc1_ref, bc1_ref, wc2_ref, bc2_ref, wc3_ref, bc3_ref,
                         cat_out_ref, enc_out_ref):
    M = bblk * T                        # rows handled this grid step

    rows = lax.broadcasted_iota(jnp.int32, (M, 1), 0)
    row_in_seq = rows % T               # position within each length-T sequence

    # Masks for the 4 off-centre conv taps — hoisted: computed once, reused by all
    # three convs.  They zero pltpu.roll's circular wrap and any cross-sequence
    # rows inside the flattened (bblk*T) block (per-sequence 'same' padding).
    tap_mask = {}
    for k in range(KSIZE):
        sh = PADL - k
        if sh > 0:                      # tap reads t-1 / t-2
            tap_mask[k] = row_in_seq >= sh
        elif sh < 0:                    # tap reads t+1 / t+2
            tap_mask[k] = row_in_seq < T + sh

    # ---- nn.Embedding(padding_idx=PAD): one-hot @ table, one bf16 MXU dot ----
    cols = lax.broadcasted_iota(jnp.int32, (M, N_PITCH), 1)
    onehot = (cols == pitch_ref[...]).astype(jnp.float32).astype(jnp.bfloat16)
    emb = jnp.dot(onehot, table_ref[...],
                  preferred_element_type=jnp.float32)            # (M, D) f32 (exact)

    # ---- repeat_interleave(ref_pitch_emb, T): r10 precomputed in the wrapper ----
    if bblk == 1:
        ref_rep = jnp.broadcast_to(r10_ref[...], (M, REF_DIM))   # sublane broadcast
    else:
        local_b = rows // T                                      # batch id within block
        sel = (lax.broadcasted_iota(jnp.int32, (M, bblk), 1) == local_b
               ).astype(jnp.float32)
        ref_rep = jnp.dot(sel, r10_ref[...],
                          preferred_element_type=jnp.float32)    # (M, REF_DIM)

    # torch.cat((emb, ref_rep), dim=2) — emitted directly as a kernel output.
    cat = jnp.concatenate([emb, ref_rep], axis=-1)               # (M, D + 10) f32
    cat_out_ref[...] = cat
    # TODO(synk): if downstream accepts bf16 (or a lane-dense packed slab), casting
    # these stores would halve the dominant HBM writeback at realistic B*T.

    # 'same' Conv1d (k=5, pad=2) as ONE fused bf16 matmul per layer: the 5 shifted
    # taps are built with pltpu.roll along the row (sublane) axis — no scratch
    # buffer, no store/reload — masked for per-sequence zero padding, stacked along
    # lanes (im2col) and contracted against the (KSIZE*Cin, Cout) weight.
    def conv_same(x, w2d_ref, b_ref):
        taps = []
        for k in range(KSIZE):
            sh = PADL - k               # tap k reads row r - sh  (= x[t + k - PADL])
            if sh == 0:
                tap = x
            else:
                tap = pltpu.roll(x, shift=sh % M, axis=0)        # XLU sublane rotate
                tap = jnp.where(tap_mask[k], tap, 0.0)
            taps.append(tap)
        # TODO(synk): verify the non-128-aligned lane concat lowering; if it emits
        # heavy lane-permute traffic, zero-pad CAT_DIM to 64 host-side.
        xcol = jnp.concatenate(taps, axis=-1).astype(jnp.bfloat16)   # (M, KSIZE*Cin)
        return jnp.dot(xcol, w2d_ref[...],
                       preferred_element_type=jnp.float32) + b_ref[...]

    h1 = jnp.maximum(conv_same(cat, wc1_ref, bc1_ref), 0.0)      # K = 5*42 = 210
    h2 = jnp.maximum(conv_same(h1, wc2_ref, bc2_ref), 0.0)       # K = 5*32 = 160
    enc_out_ref[...] = conv_same(h2, wc3_ref, bc3_ref)           # K = 160, no ReLU


def _ref_mlp(ref_encoding_sap, params):
    """ref_emb_to_pitch_emb, hoisted out of the kernel (tiny (B, .) MLP)."""
    r = ref_encoding_sap.reshape(-1, D_MODEL)                    # .squeeze(1)
    hp_ = lax.Precision.HIGHEST
    h = jax.nn.relu(jnp.dot(r, params["w1"], precision=hp_) + params["b1"])
    h = jax.nn.relu(jnp.dot(h, params["w2"], precision=hp_) + params["b2"])
    return jnp.dot(h, params["w3"], precision=hp_) + params["b3"]   # (B, REF_DIM)


def note_encoder_forward(note_pitch, ref_encoding_sap, params, *, bblk=None):
    B, T = note_pitch.shape
    if T % 8 != 0:
        raise ValueError("this kernel requires T to be a multiple of 8")
    if bblk is None:
        # several batch rows per grid step, but keep grid >= 2 whenever B >= 2 so the
        # batch axis can actually shard across v7x's two TensorCores.
        cap = min(max(B // 2, 1), 8)
        bblk = max(d for d in range(1, cap + 1) if B % d == 0)
    assert B % bblk == 0
    grid_b = B // bblk
    M = bblk * T
    # TODO(synk): for very long T (v7x: 64 MiB VMEM) add a T grid axis with a
    # PADL-row halo instead of full-T blocks, and feed pitch ids as a dense
    # (grid, bblk, T) tile instead of the lane-padded (B*T, 1) column.

    pitch_flat = note_pitch.astype(jnp.int32).reshape(B * T, 1)

    # ref_emb_to_pitch_emb hoisted to plain JAX (was recomputed every grid step).
    r10 = _ref_mlp(ref_encoding_sap, params).astype(jnp.float32)     # (B, REF_DIM)
    r10_blk = r10.reshape(grid_b, bblk, REF_DIM)

    # Host-side weight prep: conv weights as (KSIZE*Cin, Cout) for tap-fused matmuls,
    # cast to bf16 (MXU operands); biases and accumulation stay f32.
    # conv1's input channels are [emb (D) | ref (REF_DIM)] in that order.
    table_bf = params["emb_table"].astype(jnp.bfloat16)
    wc1 = jnp.concatenate([params["wc1a"], params["wc1b"]], axis=1)
    wc1 = wc1.reshape(KSIZE * CAT_DIM, D_MODEL).astype(jnp.bfloat16)
    wc2 = params["wc2"].reshape(KSIZE * D_MODEL, D_MODEL).astype(jnp.bfloat16)
    wc3 = params["wc3"].reshape(KSIZE * D_MODEL, D_MODEL).astype(jnp.bfloat16)

    full2 = lambda shape: pl.BlockSpec(shape, lambda i: (0, 0))   # resident blocks
    # TODO(synk): pipeline_mode=pl.Buffered(1) would single-buffer these residents.

    flops = 2 * B * T * (N_PITCH * D_MODEL                        # embedding one-hot dot
                         + (bblk if bblk > 1 else 0) * REF_DIM    # ref broadcast selector
                         + KSIZE * CAT_DIM * D_MODEL              # conv1
                         + 2 * KSIZE * D_MODEL * D_MODEL)         # conv2 + conv3
    bytes_accessed = (4 * (B * T + B * REF_DIM                    # pitch ids, r10
                           + B * T * CAT_DIM + B * T * D_MODEL    # outputs
                           + 3 * D_MODEL)                         # biases
                      + 2 * (N_PITCH * D_MODEL                    # bf16 table + conv weights
                             + KSIZE * CAT_DIM * D_MODEL
                             + 2 * KSIZE * D_MODEL * D_MODEL))

    kernel = pl.pallas_call(
        functools.partial(_note_encoder_kernel, T, bblk),
        out_shape=(
            jax.ShapeDtypeStruct((B * T, CAT_DIM), jnp.float32),  # note_pitch_embed (flat)
            jax.ShapeDtypeStruct((B * T, D_MODEL), jnp.float32),  # enc_output (flat)
        ),
        grid_spec=pltpu.PrefetchScalarGridSpec(
            num_scalar_prefetch=0,
            grid=(grid_b,),
            in_specs=[
                pl.BlockSpec((M, 1), lambda i: (i, 0)),                   # pitch ids
                pl.BlockSpec((None, bblk, REF_DIM), lambda i: (i, 0, 0)), # r10 per step
                full2((N_PITCH, D_MODEL)),                                # emb table (bf16)
                full2((KSIZE * CAT_DIM, D_MODEL)), full2((1, D_MODEL)),   # conv1 w (bf16), b
                full2((KSIZE * D_MODEL, D_MODEL)), full2((1, D_MODEL)),   # conv2 w (bf16), b
                full2((KSIZE * D_MODEL, D_MODEL)), full2((1, D_MODEL)),   # conv3 w (bf16), b
            ],
            out_specs=(
                pl.BlockSpec((M, CAT_DIM), lambda i: (i, 0)),
                pl.BlockSpec((M, D_MODEL), lambda i: (i, 0)),
            ),
        ),
        compiler_params=pltpu.CompilerParams(
            dimension_semantics=("parallel",),                     # shard batch over TCs
            vmem_limit_bytes=32 * 1024 * 1024),                    # v5e default is 16 MiB
        cost_estimate=pl.CostEstimate(flops=flops, transcendentals=0,
                                      bytes_accessed=bytes_accessed),
    )

    cat_flat, enc_flat = kernel(
        pitch_flat, r10_blk, table_bf,
        wc1, params["bc1"], wc2, params["bc2"], wc3, params["bc3"])

    return (cat_flat.reshape(B, T, CAT_DIM),       # row-major split, no data movement
            enc_flat.reshape(B, T, D_MODEL))


def reference_forward(note_pitch, ref_encoding_sap, params):
    """Pure-JAX reference mirroring the PyTorch forward (channels-last)."""
    B, T = note_pitch.shape
    emb = params["emb_table"][note_pitch]                          # (B, T, D)
    r = ref_encoding_sap.reshape(B, D_MODEL)
    hp_ = lax.Precision.HIGHEST
    h = jax.nn.relu(jnp.dot(r, params["w1"], precision=hp_) + params["b1"])
    h = jax.nn.relu(jnp.dot(h, params["w2"], precision=hp_) + params["b2"])
    r10 = jnp.dot(h, params["w3"], precision=hp_) + params["b3"]   # (B, 10)
    ref_rep = jnp.broadcast_to(r10[:, None, :], (B, T, REF_DIM))
    cat = jnp.concatenate([emb, ref_rep], axis=2)                  # (B, T, D+10)

    def conv1d(x, w_kio, b):
        y = lax.conv_general_dilated(x, w_kio, window_strides=(1,), padding="SAME",
                                     dimension_numbers=("NWC", "WIO", "NWC"),
                                     precision=hp_)
        return y + b

    wc1 = jnp.concatenate([params["wc1a"], params["wc1b"]], axis=1)
    h1 = jax.nn.relu(conv1d(cat, wc1, params["bc1"]))
    h2 = jax.nn.relu(conv1d(h1, params["wc2"], params["bc2"]))
    h3 = conv1d(h2, params["wc3"], params["bc3"])
    return cat, h3


if __name__ == "__main__":
    B, T = 2, 16
    key = jax.random.PRNGKey(0)
    ks = jax.random.split(key, 16)

    def init(k, shape, scale=0.05):
        return scale * jax.random.normal(k, shape, dtype=jnp.float32)

    emb_table = init(ks[0], (N_PITCH, D_MODEL)).at[PAD_IDX].set(0.0)  # padding_idx row = 0
    params = dict(
        emb_table=emb_table,
        w1=init(ks[1], (D_MODEL, D_MODEL)), b1=init(ks[2], (1, D_MODEL)),
        w2=init(ks[3], (D_MODEL, MID_DIM)), b2=init(ks[4], (1, MID_DIM)),
        w3=init(ks[5], (MID_DIM, REF_DIM)), b3=init(ks[6], (1, REF_DIM)),
        wc1a=init(ks[7], (KSIZE, D_MODEL, D_MODEL)),      # conv1 weight, emb channels
        wc1b=init(ks[8], (KSIZE, REF_DIM, D_MODEL)),      # conv1 weight, ref channels
        bc1=init(ks[9], (1, D_MODEL)),
        wc2=init(ks[10], (KSIZE, D_MODEL, D_MODEL)), bc2=init(ks[11], (1, D_MODEL)),
        wc3=init(ks[12], (KSIZE, D_MODEL, D_MODEL)), bc3=init(ks[13], (1, D_MODEL)),
    )

    note_pitch = jax.random.randint(ks[14], (B, T), 0, N_PITCH, dtype=jnp.int32)
    ref_encoding_sap = jax.random.normal(ks[15], (B, 1, D_MODEL), dtype=jnp.float32)

    note_pitch_embed, enc_output = jax.block_until_ready(
        note_encoder_forward(note_pitch, ref_encoding_sap, params))

    ref_cat, ref_enc = reference_forward(note_pitch, ref_encoding_sap, params)
    assert note_pitch_embed.shape == (B, T, CAT_DIM)
    assert enc_output.shape == (B, T, D_MODEL)
    assert jnp.allclose(note_pitch_embed, ref_cat, atol=2e-3, rtol=2e-3)
    assert jnp.allclose(enc_output, ref_enc, atol=2e-3, rtol=2e-3)

    print("KERNEL_OK")
</pallas_src>

<mosaic_0001>
module attributes {stable_mosaic.version = 11 : i64} {
  func.func @_note_encoder_kernel(%arg0: i32, %arg1: memref<16x1xi32, #tpu.memory_space<vmem>>, %arg2: memref<1x1x10xf32, #tpu.memory_space<vmem>>, %arg3: memref<64x32xbf16, #tpu.memory_space<vmem>>, %arg4: memref<210x32xbf16, #tpu.memory_space<vmem>>, %arg5: memref<1x32xf32, #tpu.memory_space<vmem>>, %arg6: memref<160x32xbf16, #tpu.memory_space<vmem>>, %arg7: memref<1x32xf32, #tpu.memory_space<vmem>>, %arg8: memref<160x32xbf16, #tpu.memory_space<vmem>>, %arg9: memref<1x32xf32, #tpu.memory_space<vmem>>, %arg10: memref<16x42xf32, #tpu.memory_space<vmem>>, %arg11: memref<16x32xf32, #tpu.memory_space<vmem>>) attributes {dimension_semantics = [#tpu.dimension_semantics<parallel>], iteration_bounds = array<i64: 2>, scalar_prefetch = 0 : i64, scratch_operands = 0 : i64, tpu.core_type = #tpu.core_type<tc>, window_params = [{transform_indices = @transform_0, window_bounds = array<i64: 16, 1>}, {transform_indices = @transform_1, window_bounds = array<i64: 1, 1, 10>}, {pipeline_mode = #tpu.pipeline_mode<synchronous>, transform_indices = @transform_2, window_bounds = array<i64: 64, 32>}, {pipeline_mode = #tpu.pipeline_mode<synchronous>, transform_indices = @transform_3, window_bounds = array<i64: 210, 32>}, {pipeline_mode = #tpu.pipeline_mode<synchronous>, transform_indices = @transform_4, window_bounds = array<i64: 1, 32>}, {pipeline_mode = #tpu.pipeline_mode<synchronous>, transform_indices = @transform_5, window_bounds = array<i64: 160, 32>}, {pipeline_mode = #tpu.pipeline_mode<synchronous>, transform_indices = @transform_6, window_bounds = array<i64: 1, 32>}, {pipeline_mode = #tpu.pipeline_mode<synchronous>, transform_indices = @transform_7, window_bounds = array<i64: 160, 32>}, {pipeline_mode = #tpu.pipeline_mode<synchronous>, transform_indices = @transform_8, window_bounds = array<i64: 1, 32>}, {transform_indices = @transform_9, window_bounds = array<i64: 16, 42>}, {transform_indices = @transform_10, window_bounds = array<i64: 16, 32>}]} {
    %0 = tpu.iota {dimensions = array<i32: 0>} : vector<16x1xi32>
    %c16_i32 = arith.constant 16 : i32
    %c0_i32 = arith.constant 0 : i32
    %1 = arith.cmpi eq, %c16_i32, %c0_i32 : i32
    %c1_i32 = arith.constant 1 : i32
    %2 = arith.select %1, %c1_i32, %c16_i32 : i32
    %3 = vector.broadcast %2 : i32 to vector<16x1xi32>
    %4 = arith.remsi %0, %3 : vector<16x1xi32>
    %c0_i32_0 = arith.constant 0 : i32
    %5 = vector.broadcast %c0_i32_0 : i32 to vector<16x1xi32>
    %6 = arith.cmpi ne, %4, %5 : vector<16x1xi32>
    %c0_i32_1 = arith.constant 0 : i32
    %7 = vector.broadcast %c0_i32_1 : i32 to vector<16x1xi32>
    %8 = arith.cmpi slt, %4, %7 : vector<16x1xi32>
    %c0_i32_2 = arith.constant 0 : i32
    %9 = arith.cmpi slt, %2, %c0_i32_2 : i32
    %10 = vector.broadcast %9 : i1 to vector<16x1xi1>
    %11 = vector.broadcast %10 : vector<16x1xi1> to vector<16x1xi1>
    %12 = arith.xori %8, %11 : vector<16x1xi1>
    %13 = arith.andi %12, %6 : vector<16x1xi1>
    %14 = vector.broadcast %2 : i32 to vector<16x1xi32>
    %15 = arith.addi %4, %14 : vector<16x1xi32>
    %16 = arith.select %13, %15, %4 : vector<16x1xi1>, vector<16x1xi32>
    %c2_i32 = arith.constant 2 : i32
    %17 = vector.broadcast %c2_i32 : i32 to vector<16x1xi32>
    %18 = arith.cmpi sge, %16, %17 : vector<16x1xi32>
    %c1_i32_3 = arith.constant 1 : i32
    %19 = vector.broadcast %c1_i32_3 : i32 to vector<16x1xi32>
    %20 = arith.cmpi sge, %16, %19 : vector<16x1xi32>
    %c15_i32 = arith.constant 15 : i32
    %21 = vector.broadcast %c15_i32 : i32 to vector<16x1xi32>
    %22 = arith.cmpi slt, %16, %21 : vector<16x1xi32>
    %c14_i32 = arith.constant 14 : i32
    %23 = vector.broadcast %c14_i32 : i32 to vector<16x1xi32>
    %24 = arith.cmpi slt, %16, %23 : vector<16x1xi32>
    %25 = tpu.iota {dimensions = array<i32: 1>} : vector<16x64xi32>
    %c0 = arith.constant 0 : index
    %c0_4 = arith.constant 0 : index
    %26 = vector.load %arg1[%c0, %c0_4] : memref<16x1xi32, #tpu.memory_space<vmem>>, vector<16x1xi32>
    %27 = vector.broadcast %26 : vector<16x1xi32> to vector<16x64xi32>
    %28 = arith.cmpi eq, %25, %27 : vector<16x64xi32>
    %29 = arith.extui %28 : vector<16x64xi1> to vector<16x64xi32>
    %30 = arith.sitofp %29 : vector<16x64xi32> to vector<16x64xf32>
    %31 = arith.truncf %30 : vector<16x64xf32> to vector<16x64xbf16>
    %c0_5 = arith.constant 0 : index
    %c0_6 = arith.constant 0 : index
    %32 = vector.load %arg3[%c0_5, %c0_6] : memref<64x32xbf16, #tpu.memory_space<vmem>>, vector<64x32xbf16>
    %cst = arith.constant dense<0.000000e+00> : vector<16x32xf32>
    %33 = tpu.matmul %31, %32, %cst {dimension_numbers = #tpu.dot_dimension_numbers<[1], [0], [0], [1], [0, 0, 1, 1], [], []>} : vector<16x64xbf16>, vector<64x32xbf16>, vector<16x32xf32> -> vector<16x32xf32>
    %c0_7 = arith.constant 0 : index
    %c0_8 = arith.constant 0 : index
    %c0_9 = arith.constant 0 : index
    %34 = vector.load %arg2[%c0_7, %c0_8, %c0_9] : memref<1x1x10xf32, #tpu.memory_space<vmem>>, vector<1x1x10xf32>
    %35 = vector.shape_cast %34 : vector<1x1x10xf32> to vector<1x10xf32>
    %36 = vector.shape_cast %35 : vector<1x10xf32> to vector<1x10xf32>
    %37 = vector.broadcast %36 : vector<1x10xf32> to vector<16x10xf32>
    %38 = tpu.concatenate %33, %37 in 1 : vector<16x32xf32>, vector<16x10xf32> -> vector<16x42xf32>
    %c0_10 = arith.constant 0 : index
    %c0_11 = arith.constant 0 : index
    %39 = vector.load %arg10[%c0_10, %c0_11] : memref<16x42xf32, #tpu.memory_space<vmem>>, vector<16x42xf32>
    tpu.vector_store %arg10[%c0_10, %c0_11], %38 {strides = array<i32>} : memref<16x42xf32, #tpu.memory_space<vmem>>, vector<16x42xf32>,
    %c2_i32_12 = arith.constant 2 : i32
    %40 = tpu.dynamic_rotate %38 by %c2_i32_12 dim 0 : vector<16x42xf32>, i32 -> vector<16x42xf32>
    %cst_13 = arith.constant 0.000000e+00 : f32
    %41 = vector.shape_cast %18 : vector<16x1xi1> to vector<16x1xi1>
    %42 = vector.broadcast %41 : vector<16x1xi1> to vector<16x42xi1>
    %43 = vector.broadcast %cst_13 : f32 to vector<16x42xf32>
    %44 = arith.select %42, %40, %43 : vector<16x42xi1>, vector<16x42xf32>
    %c1_i32_14 = arith.constant 1 : i32
    %45 = tpu.dynamic_rotate %38 by %c1_i32_14 dim 0 : vector<16x42xf32>, i32 -> vector<16x42xf32>
    %cst_15 = arith.constant 0.000000e+00 : f32
    %46 = vector.shape_cast %20 : vector<16x1xi1> to vector<16x1xi1>
    %47 = vector.broadcast %46 : vector<16x1xi1> to vector<16x42xi1>
    %48 = vector.broadcast %cst_15 : f32 to vector<16x42xf32>
    %49 = arith.select %47, %45, %48 : vector<16x42xi1>, vector<16x42xf32>
    %c15_i32_16 = arith.constant 15 : i32
    %50 = tpu.dynamic_rotate %38 by %c15_i32_16 dim 0 : vector<16x42xf32>, i32 -> vector<16x42xf32>
    %cst_17 = arith.constant 0.000000e+00 : f32
    %51 = vector.shape_cast %22 : vector<16x1xi1> to vector<16x1xi1>
    %52 = vector.broadcast %51 : vector<16x1xi1> to vector<16x42xi1>
    %53 = vector.broadcast %cst_17 : f32 to vector<16x42xf32>
    %54 = arith.select %52, %50, %53 : vector<16x42xi1>, vector<16x42xf32>
    %c14_i32_18 = arith.constant 14 : i32
    %55 = tpu.dynamic_rotate %38 by %c14_i32_18 dim 0 : vector<16x42xf32>, i32 -> vector<16x42xf32>
    %cst_19 = arith.constant 0.000000e+00 : f32
    %56 = vector.shape_cast %24 : vector<16x1xi1> to vector<16x1xi1>
    %57 = vector.broadcast %56 : vector<16x1xi1> to vector<16x42xi1>
    %58 = vector.broadcast %cst_19 : f32 to vector<16x42xf32>
    %59 = arith.select %57, %55, %58 : vector<16x42xi1>, vector<16x42xf32>
    %60 = tpu.concatenate %44, %49, %38, %54, %59 in 1 : vector<16x42xf32>, vector<16x42xf32>, vector<16x42xf32>, vector<16x42xf32>, vector<16x42xf32> -> vector<16x210xf32>
    %61 = arith.truncf %60 : vector<16x210xf32> to vector<16x210xbf16>
    %c0_20 = arith.constant 0 : index
    %c0_21 = arith.constant 0 : index
    %62 = vector.load %arg4[%c0_20, %c0_21] : memref<210x32xbf16, #tpu.memory_space<vmem>>, vector<210x32xbf16>
    %cst_22 = arith.constant dense<0.000000e+00> : vector<16x32xf32>
    %63 = tpu.matmul %61, %62, %cst_22 {dimension_numbers = #tpu.dot_dimension_numbers<[1], [0], [0], [1], [0, 0, 1, 1], [], []>} : vector<16x210xbf16>, vector<210x32xbf16>, vector<16x32xf32> -> vector<16x32xf32>
    %c0_23 = arith.constant 0 : index
    %c0_24 = arith.constant 0 : index
    %64 = vector.load %arg5[%c0_23, %c0_24] : memref<1x32xf32, #tpu.memory_space<vmem>>, vector<1x32xf32>
    %65 = vector.broadcast %64 : vector<1x32xf32> to vector<16x32xf32>
    %66 = arith.addf %63, %65 : vector<16x32xf32>
    %cst_25 = arith.constant 0.000000e+00 : f32
    %67 = vector.broadcast %cst_25 : f32 to vector<16x32xf32>
    %68 = arith.maximumf %66, %67 : vector<16x32xf32>
    %c2_i32_26 = arith.constant 2 : i32
    %69 = tpu.dynamic_rotate %68 by %c2_i32_26 dim 0 : vector<16x32xf32>, i32 -> vector<16x32xf32>
    %cst_27 = arith.constant 0.000000e+00 : f32
    %70 = vector.shape_cast %18 : vector<16x1xi1> to vector<16x1xi1>
    %71 = vector.broadcast %70 : vector<16x1xi1> to vector<16x32xi1>
    %72 = vector.broadcast %cst_27 : f32 to vector<16x32xf32>
    %73 = arith.select %71, %69, %72 : vector<16x32xi1>, vector<16x32xf32>
    %c1_i32_28 = arith.constant 1 : i32
    %74 = tpu.dynamic_rotate %68 by %c1_i32_28 dim 0 : vector<16x32xf32>, i32 -> vector<16x32xf32>
    %cst_29 = arith.constant 0.000000e+00 : f32
    %75 = vector.shape_cast %20 : vector<16x1xi1> to vector<16x1xi1>
    %76 = vector.broadcast %75 : vector<16x1xi1> to vector<16x32xi1>
    %77 = vector.broadcast %cst_29 : f32 to vector<16x32xf32>
    %78 = arith.select %76, %74, %77 : vector<16x32xi1>, vector<16x32xf32>
    %c15_i32_30 = arith.constant 15 : i32
    %79 = tpu.dynamic_rotate %68 by %c15_i32_30 dim 0 : vector<16x32xf32>, i32 -> vector<16x32xf32>
    %cst_31 = arith.constant 0.000000e+00 : f32
    %80 = vector.shape_cast %22 : vector<16x1xi1> to vector<16x1xi1>
    %81 = vector.broadcast %80 : vector<16x1xi1> to vector<16x32xi1>
    %82 = vector.broadcast %cst_31 : f32 to vector<16x32xf32>
    %83 = arith.select %81, %79, %82 : vector<16x32xi1>, vector<16x32xf32>
    %c14_i32_32 = arith.constant 14 : i32
    %84 = tpu.dynamic_rotate %68 by %c14_i32_32 dim 0 : vector<16x32xf32>, i32 -> vector<16x32xf32>
    %cst_33 = arith.constant 0.000000e+00 : f32
    %85 = vector.shape_cast %24 : vector<16x1xi1> to vector<16x1xi1>
    %86 = vector.broadcast %85 : vector<16x1xi1> to vector<16x32xi1>
    %87 = vector.broadcast %cst_33 : f32 to vector<16x32xf32>
    %88 = arith.select %86, %84, %87 : vector<16x32xi1>, vector<16x32xf32>
    %89 = tpu.concatenate %73, %78, %68, %83, %88 in 1 : vector<16x32xf32>, vector<16x32xf32>, vector<16x32xf32>, vector<16x32xf32>, vector<16x32xf32> -> vector<16x160xf32>
    %90 = arith.truncf %89 : vector<16x160xf32> to vector<16x160xbf16>
    %c0_34 = arith.constant 0 : index
    %c0_35 = arith.constant 0 : index
    %91 = vector.load %arg6[%c0_34, %c0_35] : memref<160x32xbf16, #tpu.memory_space<vmem>>, vector<160x32xbf16>
    %cst_36 = arith.constant dense<0.000000e+00> : vector<16x32xf32>
    %92 = tpu.matmul %90, %91, %cst_36 {dimension_numbers = #tpu.dot_dimension_numbers<[1], [0], [0], [1], [0, 0, 1, 1], [], []>} : vector<16x160xbf16>, vector<160x32xbf16>, vector<16x32xf32> -> vector<16x32xf32>
    %c0_37 = arith.constant 0 : index
    %c0_38 = arith.constant 0 : index
    %93 = vector.load %arg7[%c0_37, %c0_38] : memref<1x32xf32, #tpu.memory_space<vmem>>, vector<1x32xf32>
    %94 = vector.broadcast %93 : vector<1x32xf32> to vector<16x32xf32>
    %95 = arith.addf %92, %94 : vector<16x32xf32>
    %cst_39 = arith.constant 0.000000e+00 : f32
    %96 = vector.broadcast %cst_39 : f32 to vector<16x32xf32>
    %97 = arith.maximumf %95, %96 : vector<16x32xf32>
    %c2_i32_40 = arith.constant 2 : i32
    %98 = tpu.dynamic_rotate %97 by %c2_i32_40 dim 0 : vector<16x32xf32>, i32 -> vector<16x32xf32>
    %cst_41 = arith.constant 0.000000e+00 : f32
    %99 = vector.shape_cast %18 : vector<16x1xi1> to vector<16x1xi1>
    %100 = vector.broadcast %99 : vector<16x1xi1> to vector<16x32xi1>
    %101 = vector.broadcast %cst_41 : f32 to vector<16x32xf32>
    %102 = arith.select %100, %98, %101 : vector<16x32xi1>, vector<16x32xf32>
    %c1_i32_42 = arith.constant 1 : i32
    %103 = tpu.dynamic_rotate %97 by %c1_i32_42 dim 0 : vector<16x32xf32>, i32 -> vector<16x32xf32>
    %cst_43 = arith.constant 0.000000e+00 : f32
    %104 = vector.shape_cast %20 : vector<16x1xi1> to vector<16x1xi1>
    %105 = vector.broadcast %104 : vector<16x1xi1> to vector<16x32xi1>
    %106 = vector.broadcast %cst_43 : f32 to vector<16x32xf32>
    %107 = arith.select %105, %103, %106 : vector<16x32xi1>, vector<16x32xf32>
    %c15_i32_44 = arith.constant 15 : i32
    %108 = tpu.dynamic_rotate %97 by %c15_i32_44 dim 0 : vector<16x32xf32>, i32 -> vector<16x32xf32>
    %cst_45 = arith.constant 0.000000e+00 : f32
    %109 = vector.shape_cast %22 : vector<16x1xi1> to vector<16x1xi1>
    %110 = vector.broadcast %109 : vector<16x1xi1> to vector<16x32xi1>
    %111 = vector.broadcast %cst_45 : f32 to vector<16x32xf32>
    %112 = arith.select %110, %108, %111 : vector<16x32xi1>, vector<16x32xf32>
    %c14_i32_46 = arith.constant 14 : i32
    %113 = tpu.dynamic_rotate %97 by %c14_i32_46 dim 0 : vector<16x32xf32>, i32 -> vector<16x32xf32>
    %cst_47 = arith.constant 0.000000e+00 : f32
    %114 = vector.shape_cast %24 : vector<16x1xi1> to vector<16x1xi1>
    %115 = vector.broadcast %114 : vector<16x1xi1> to vector<16x32xi1>
    %116 = vector.broadcast %cst_47 : f32 to vector<16x32xf32>
    %117 = arith.select %115, %113, %116 : vector<16x32xi1>, vector<16x32xf32>
    %118 = tpu.concatenate %102, %107, %97, %112, %117 in 1 : vector<16x32xf32>, vector<16x32xf32>, vector<16x32xf32>, vector<16x32xf32>, vector<16x32xf32> -> vector<16x160xf32>
    %119 = arith.truncf %118 : vector<16x160xf32> to vector<16x160xbf16>
    %c0_48 = arith.constant 0 : index
    %c0_49 = arith.constant 0 : index
    %120 = vector.load %arg8[%c0_48, %c0_49] : memref<160x32xbf16, #tpu.memory_space<vmem>>, vector<160x32xbf16>
    %cst_50 = arith.constant dense<0.000000e+00> : vector<16x32xf32>
    %121 = tpu.matmul %119, %120, %cst_50 {dimension_numbers = #tpu.dot_dimension_numbers<[1], [0], [0], [1], [0, 0, 1, 1], [], []>} : vector<16x160xbf16>, vector<160x32xbf16>, vector<16x32xf32> -> vector<16x32xf32>
    %c0_51 = arith.constant 0 : index
    %c0_52 = arith.constant 0 : index
    %122 = vector.load %arg9[%c0_51, %c0_52] : memref<1x32xf32, #tpu.memory_space<vmem>>, vector<1x32xf32>
    %123 = vector.broadcast %122 : vector<1x32xf32> to vector<16x32xf32>
    %124 = arith.addf %121, %123 : vector<16x32xf32>
    %c0_53 = arith.constant 0 : index
    %c0_54 = arith.constant 0 : index
    %125 = vector.load %arg11[%c0_53, %c0_54] : memref<16x32xf32, #tpu.memory_space<vmem>>, vector<16x32xf32>
    tpu.vector_store %arg11[%c0_53, %c0_54], %124 {strides = array<i32>} : memref<16x32xf32, #tpu.memory_space<vmem>>, vector<16x32xf32>,
    return
  }
  func.func @transform_0(%arg0: i32) -> (i32, i32) {
    %c0_i32 = arith.constant 0 : i32
    %c0_i32_0 = arith.constant 0 : i32
    return %arg0, %c0_i32 : i32, i32
  }
  func.func @transform_1(%arg0: i32) -> (i32, i32, i32) {
    %c0_i32 = arith.constant 0 : i32
    %c0_i32_0 = arith.constant 0 : i32
    %c0_i32_1 = arith.constant 0 : i32
    return %arg0, %c0_i32, %c0_i32_0 : i32, i32, i32
  }
  func.func @transform_2(%arg0: i32) -> (i32, i32) {
    %c0_i32 = arith.constant 0 : i32
    %c0_i32_0 = arith.constant 0 : i32
    %c0_i32_1 = arith.constant 0 : i32
    return %c0_i32, %c0_i32_0 : i32, i32
  }
  func.func @transform_3(%arg0: i32) -> (i32, i32) {
    %c0_i32 = arith.constant 0 : i32
    %c0_i32_0 = arith.constant 0 : i32
    %c0_i32_1 = arith.constant 0 : i32
    return %c0_i32, %c0_i32_0 : i32, i32
  }
  func.func @transform_4(%arg0: i32) -> (i32, i32) {
    %c0_i32 = arith.constant 0 : i32
    %c0_i32_0 = arith.constant 0 : i32
    %c0_i32_1 = arith.constant 0 : i32
    return %c0_i32, %c0_i32_0 : i32, i32
  }
  func.func @transform_5(%arg0: i32) -> (i32, i32) {
    %c0_i32 = arith.constant 0 : i32
    %c0_i32_0 = arith.constant 0 : i32
    %c0_i32_1 = arith.constant 0 : i32
    return %c0_i32, %c0_i32_0 : i32, i32
  }
  func.func @transform_6(%arg0: i32) -> (i32, i32) {
    %c0_i32 = arith.constant 0 : i32
    %c0_i32_0 = arith.constant 0 : i32
    %c0_i32_1 = arith.constant 0 : i32
    return %c0_i32, %c0_i32_0 : i32, i32
  }
  func.func @transform_7(%arg0: i32) -> (i32, i32) {
    %c0_i32 = arith.constant 0 : i32
    %c0_i32_0 = arith.constant 0 : i32
    %c0_i32_1 = arith.constant 0 : i32
    return %c0_i32, %c0_i32_0 : i32, i32
  }
  func.func @transform_8(%arg0: i32) -> (i32, i32) {
    %c0_i32 = arith.constant 0 : i32
    %c0_i32_0 = arith.constant 0 : i32
    %c0_i32_1 = arith.constant 0 : i32
    return %c0_i32, %c0_i32_0 : i32, i32
  }
  func.func @transform_9(%arg0: i32) -> (i32, i32) {
    %c0_i32 = arith.constant 0 : i32
    %c0_i32_0 = arith.constant 0 : i32
    return %arg0, %c0_i32 : i32, i32
  }
  func.func @transform_10(%arg0: i32) -> (i32, i32) {
    %c0_i32 = arith.constant 0 : i32
    %c0_i32_0 = arith.constant 0 : i32
    return %arg0, %c0_i32 : i32, i32
  }
}

</mosaic_0001>

<llo_original>
// kernel: tpu_custom_call.1
$region0: #{tpu_custom_call.1}
  #allocation0 [shape = 'u32[]', space=smem, size = 0x4, offset = 0x4, fixed_abs, tag = 'smem constant byte address 0x4 - core index']
  #allocation1 [shape = 'u32[144,128]{1,0:T(1,128)}', space=vmem, size = 0x12000, scoped, tag = 'internal scratch']
  %s0 = inlined_call_operand.vmem [shape: s32[32,1], index: 0, kind: input, shape index: {}]
  %s1 = inlined_call_operand.vmem [shape: f32[2,1,10], index: 1, kind: input, shape index: {}]
  %s2 = inlined_call_operand.vmem [shape: bf16[64,32], index: 2, kind: input, shape index: {}]
  %s3 = inlined_call_operand.vmem [shape: bf16[210,32], index: 3, kind: input, shape index: {}]
  %s4 = inlined_call_operand.vmem [shape: f32[1,32], index: 4, kind: input, shape index: {}]
  %s5 = inlined_call_operand.vmem [shape: bf16[160,32], index: 5, kind: input, shape index: {}]
  %s6 = inlined_call_operand.vmem [shape: f32[1,32], index: 6, kind: input, shape index: {}]
  %s7 = inlined_call_operand.vmem [shape: bf16[160,32], index: 7, kind: input, shape index: {}]
  %s8 = inlined_call_operand.vmem [shape: f32[1,32], index: 8, kind: input, shape index: {}]
  %s9 = inlined_call_operand.hbm [shape: f32[32,42], index: 9, kind: output, shape index: {0}]
  %s10 = inlined_call_operand.hbm [shape: f32[32,32], index: 10, kind: output, shape index: {1}]
  %11 = xla_tuple %s9, %s10
  %s12 = sld [smem:[#allocation0]]
  $region77: #{tpu_custom_call.1} parent=0
    _
  %s14 = ssub.s32 1, %s12
  %s15 = scalar_select 0, %s14, %s12
  $region1: #{tpu_custom_call.1} parent=0
    #allocation2 [shape = 'u8[16384]{0}', space=vmem, size = 0x4000, scoped, tag = 'output window, operand 0']
    #allocation3 [shape = 's32[2]{0}', space=sflag, size = 0x8, scoped, tag = 'scoped memory for tpu_custom_call.1']
    #allocation4 [shape = 'u8[16384]{0}', space=vmem, size = 0x4000, scoped, tag = 'output window, operand 1']
    #allocation5 [shape = 's32[2]{0}', space=sflag, size = 0x8, scoped, tag = 'scoped memory for tpu_custom_call.1']
    %16 = vsyncpa [#allocation3], 0
    %s17 = scalar_lea.sflag [#allocation3], 1
    %18 = vsyncpa %s17, 0
    %19 = vsyncpa [#allocation5], 0
    %s20 = scalar_lea.sflag [#allocation5], 1
    %21 = vsyncpa %s20, 0
    loop: start=0, step=1, limit=4
    $region2: #{tpu_custom_call.1} parent=1 // loop_pre_header
      _
    $region3: #{tpu_custom_call.1} parent=1 // loop_header
      %s23 = sphi 0, %s27
      %p24 = scmp.ge.s32.totalorder %s23, 4
      %s33 = sphi 0, %s35
      %s36 = sphi 0, %s33
      %s37 = sphi 0, %s36
      %s53 = sphi 0, %s37
      %s59 = sphi 0, %s61
      %s62 = sphi 0, %s59
      %s63 = sphi 0, %s62
      %s79 = sphi 0, %s63
      %s83 = sphi 0, %s83
      %s85 = sphi 0, %s83
      %s86 = sphi 0, %s85
      %s100 = sphi 0, %s86
      %s104 = sphi 0, %s104
      %s106 = sphi 0, %s104
      %s107 = sphi 0, %s106
      %s121 = sphi 0, %s107
      %s125 = sphi 0, %s125
      %s127 = sphi 0, %s125
      %s128 = sphi 0, %s127
      %s142 = sphi 0, %s128
      %s146 = sphi 0, %s146
      %s148 = sphi 0, %s146
      %s149 = sphi 0, %s148
      %s163 = sphi 0, %s149
      %s167 = sphi 0, %s167
      %s169 = sphi 0, %s167
      %s170 = sphi 0, %s169
      %s184 = sphi 0, %s170
      %s188 = sphi 0, %s188
      %s190 = sphi 0, %s188
      %s191 = sphi 0, %s190
      %s205 = sphi 0, %s191
      %s209 = sphi 0, %s209
      %s211 = sphi 0, %s209
      %s212 = sphi 0, %s211
      %s226 = sphi 0, %s212
      %s232 = sphi 0, %s234
      %s235 = sphi 0, %s232
      %s236 = sphi 0, %s235
      %s252 = sphi 0, %s236
      %s258 = sphi 0, %s260
      %s261 = sphi 0, %s258
      %s262 = sphi 0, %s261
      %s278 = sphi 0, %s262
    $region4: #{tpu_custom_call.1} parent=1 // loop_header_branch
      %26 = sbr.rel (%p24) target = $region8
    $region5: #{tpu_custom_call.1} parent=1 // loop_body
      %s28 = ssub.s32 %s23, 1
      %s29 = ssub.s32 %s23, 2
      %s30 = sadd.s32 %s23, 1
      %s31 = ssub.s32 %s23, %s30
      %p32 = scmp.eq.s32.totalorder %s31, 0
      %s34 = sadd.s32 %s33, 1
      %s35 = scalar_select %p32, %s33, %s34
      %p38 = pneg %p32
      %p39 = scmp.eq.s32.totalorder %s23, 1
      %p40 = por %p38, %p39
      %p41 = scmp.ne.s32.totalorder %s33, %s36
      %p42 = scmp.eq.s32.totalorder %s23, 0
      %p43 = por %p41, %p42
      %p44 = scmp.ne.s32.totalorder %s33, %s36
      %p45 = scmp.eq.s32.totalorder %s28, 1
      %p46 = por %p44, %p45
      %p47 = scmp.ne.s32.totalorder %s36, %s37
      %p48 = scmp.eq.s32.totalorder %s28, 0
      %p49 = por %p47, %p48
      %p50 = scmp.ne.s32.totalorder %s36, %s37
      %p51 = scmp.eq.s32.totalorder %s29, 1
      %p52 = por %p50, %p51
      %p54 = scmp.ne.s32.totalorder %s37, %s53
      %p55 = scmp.eq.s32.totalorder %s29, 0
      %p56 = por %p54, %p55
      %s57 = ssub.s32 %s23, %s30
      %p58 = scmp.eq.s32.totalorder %s57, 0
      %s60 = sadd.s32 %s59, 1
      %s61 = scalar_select %p58, %s59, %s60
      %p64 = pneg %p58
      %p65 = scmp.eq.s32.totalorder %s23, 1
      %p66 = por %p64, %p65
      %p67 = scmp.ne.s32.totalorder %s59, %s62
      %p68 = scmp.eq.s32.totalorder %s23, 0
      %p69 = por %p67, %p68
      %p70 = scmp.ne.s32.totalorder %s59, %s62
      %p71 = scmp.eq.s32.totalorder %s28, 1
      %p72 = por %p70, %p71
      %p73 = scmp.ne.s32.totalorder %s62, %s63
      %p74 = scmp.eq.s32.totalorder %s28, 0
      %p75 = por %p73, %p74
      %p76 = scmp.ne.s32.totalorder %s62, %s63
      %p77 = scmp.eq.s32.totalorder %s29, 1
      %p78 = por %p76, %p77
      %p80 = scmp.ne.s32.totalorder %s63, %s79
      %p81 = scmp.eq.s32.totalorder %s29, 0
      %p82 = por %p80, %p81
      %s84 = sadd.s32 %s83, 1
      %p87 = scmp.eq.s32.totalorder %s23, 1
      %p88 = scmp.ne.s32.totalorder %s83, %s85
      %p89 = scmp.eq.s32.totalorder %s23, 0
      %p90 = por %p88, %p89
      %p91 = scmp.ne.s32.totalorder %s83, %s85
      %p92 = scmp.eq.s32.totalorder %s28, 1
      %p93 = por %p91, %p92
      %p94 = scmp.ne.s32.totalorder %s85, %s86
      %p95 = scmp.eq.s32.totalorder %s28, 0
      %p96 = por %p94, %p95
      %p97 = scmp.ne.s32.totalorder %s85, %s86
      %p98 = scmp.eq.s32.totalorder %s29, 1
      %p99 = por %p97, %p98
      %p101 = scmp.ne.s32.totalorder %s86, %s100
      %p102 = scmp.eq.s32.totalorder %s29, 0
      %p103 = por %p101, %p102
      %s105 = sadd.s32 %s104, 1
      %p108 = scmp.eq.s32.totalorder %s23, 1
      %p109 = scmp.ne.s32.totalorder %s104, %s106
      %p110 = scmp.eq.s32.totalorder %s23, 0
      %p111 = por %p109, %p110
      %p112 = scmp.ne.s32.totalorder %s104, %s106
      %p113 = scmp.eq.s32.totalorder %s28, 1
      %p114 = por %p112, %p113
      %p115 = scmp.ne.s32.totalorder %s106, %s107
      %p116 = scmp.eq.s32.totalorder %s28, 0
      %p117 = por %p115, %p116
      %p118 = scmp.ne.s32.totalorder %s106, %s107
      %p119 = scmp.eq.s32.totalorder %s29, 1
      %p120 = por %p118, %p119
      %p122 = scmp.ne.s32.totalorder %s107, %s121
      %p123 = scmp.eq.s32.totalorder %s29, 0
      %p124 = por %p122, %p123
      %s126 = sadd.s32 %s125, 1
      %p129 = scmp.eq.s32.totalorder %s23, 1
      %p130 = scmp.ne.s32.totalorder %s125, %s127
      %p131 = scmp.eq.s32.totalorder %s23, 0
      %p132 = por %p130, %p131
      %p133 = scmp.ne.s32.totalorder %s125, %s127
      %p134 = scmp.eq.s32.totalorder %s28, 1
      %p135 = por %p133, %p134
      %p136 = scmp.ne.s32.totalorder %s127, %s128
      %p137 = scmp.eq.s32.totalorder %s28, 0
      %p138 = por %p136, %p137
      %p139 = scmp.ne.s32.totalorder %s127, %s128
      %p140 = scmp.eq.s32.totalorder %s29, 1
      %p141 = por %p139, %p140
      %p143 = scmp.ne.s32.totalorder %s128, %s142
      %p144 = scmp.eq.s32.totalorder %s29, 0
      %p145 = por %p143, %p144
      %s147 = sadd.s32 %s146, 1
      %p150 = scmp.eq.s32.totalorder %s23, 1
      %p151 = scmp.ne.s32.totalorder %s146, %s148
      %p152 = scmp.eq.s32.totalorder %s23, 0
      %p153 = por %p151, %p152
      %p154 = scmp.ne.s32.totalorder %s146, %s148
      %p155 = scmp.eq.s32.totalorder %s28, 1
      %p156 = por %p154, %p155
      %p157 = scmp.ne.s32.totalorder %s148, %s149
      %p158 = scmp.eq.s32.totalorder %s28, 0
      %p159 = por %p157, %p158
      %p160 = scmp.ne.s32.totalorder %s148, %s149
      %p161 = scmp.eq.s32.totalorder %s29, 1
      %p162 = por %p160, %p161
      %p164 = scmp.ne.s32.totalorder %s149, %s163
      %p165 = scmp.eq.s32.totalorder %s29, 0
      %p166 = por %p164, %p165
      %s168 = sadd.s32 %s167, 1
      %p171 = scmp.eq.s32.totalorder %s23, 1
      %p172 = scmp.ne.s32.totalorder %s167, %s169
      %p173 = scmp.eq.s32.totalorder %s23, 0
      %p174 = por %p172, %p173
      %p175 = scmp.ne.s32.totalorder %s167, %s169
      %p176 = scmp.eq.s32.totalorder %s28, 1
      %p177 = por %p175, %p176
      %p178 = scmp.ne.s32.totalorder %s169, %s170
      %p179 = scmp.eq.s32.totalorder %s28, 0
      %p180 = por %p178, %p179
      %p181 = scmp.ne.s32.totalorder %s169, %s170
      %p182 = scmp.eq.s32.totalorder %s29, 1
      %p183 = por %p181, %p182
      %p185 = scmp.ne.s32.totalorder %s170, %s184
      %p186 = scmp.eq.s32.totalorder %s29, 0
      %p187 = por %p185, %p186
      %s189 = sadd.s32 %s188, 1
      %p192 = scmp.eq.s32.totalorder %s23, 1
      %p193 = scmp.ne.s32.totalorder %s188, %s190
      %p194 = scmp.eq.s32.totalorder %s23, 0
      %p195 = por %p193, %p194
      %p196 = scmp.ne.s32.totalorder %s188, %s190
      %p197 = scmp.eq.s32.totalorder %s28, 1
      %p198 = por %p196, %p197
      %p199 = scmp.ne.s32.totalorder %s190, %s191
      %p200 = scmp.eq.s32.totalorder %s28, 0
      %p201 = por %p199, %p200
      %p202 = scmp.ne.s32.totalorder %s190, %s191
      %p203 = scmp.eq.s32.totalorder %s29, 1
      %p204 = por %p202, %p203
      %p206 = scmp.ne.s32.totalorder %s191, %s205
      %p207 = scmp.eq.s32.totalorder %s29, 0
      %p208 = por %p206, %p207
      %s210 = sadd.s32 %s209, 1
      %p213 = scmp.eq.s32.totalorder %s23, 1
      %p214 = scmp.ne.s32.totalorder %s209, %s211
      %p215 = scmp.eq.s32.totalorder %s23, 0
      %p216 = por %p214, %p215
      %p217 = scmp.ne.s32.totalorder %s209, %s211
      %p218 = scmp.eq.s32.totalorder %s28, 1
      %p219 = por %p217, %p218
      %p220 = scmp.ne.s32.totalorder %s211, %s212
      %p221 = scmp.eq.s32.totalorder %s28, 0
      %p222 = por %p220, %p221
      %p223 = scmp.ne.s32.totalorder %s211, %s212
      %p224 = scmp.eq.s32.totalorder %s29, 1
      %p225 = por %p223, %p224
      %p227 = scmp.ne.s32.totalorder %s212, %s226
      %p228 = scmp.eq.s32.totalorder %s29, 0
      %p229 = por %p227, %p228
      %s230 = ssub.s32 %s23, %s30
      %p231 = scmp.eq.s32.totalorder %s230, 0
      %s233 = sadd.s32 %s232, 1
      %s234 = scalar_select %p231, %s232, %s233
      %p237 = pneg %p231
      %p238 = scmp.eq.s32.totalorder %s23, 1
      %p239 = por %p237, %p238
      %p240 = scmp.ne.s32.totalorder %s232, %s235
      %p241 = scmp.eq.s32.totalorder %s23, 0
      %p242 = por %p240, %p241
      %p243 = scmp.ne.s32.totalorder %s232, %s235
      %p244 = scmp.eq.s32.totalorder %s28, 1
      %p245 = por %p243, %p244
      %p246 = scmp.ne.s32.totalorder %s235, %s236
      %p247 = scmp.eq.s32.totalorder %s28, 0
      %p248 = por %p246, %p247
      %p249 = scmp.ne.s32.totalorder %s235, %s236
      %p250 = scmp.eq.s32.totalorder %s29, 1
      %p251 = por %p249, %p250
      %p253 = scmp.ne.s32.totalorder %s236, %s252
      %p254 = scmp.eq.s32.totalorder %s29, 0
      %p255 = por %p253, %p254
      %s256 = ssub.s32 %s23, %s30
      %p257 = scmp.eq.s32.totalorder %s256, 0
      %s259 = sadd.s32 %s258, 1
      %s260 = scalar_select %p257, %s258, %s259
      %p263 = pneg %p257
      %p264 = scmp.eq.s32.totalorder %s23, 1
      %p265 = por %p263, %p264
      %p266 = scmp.ne.s32.totalorder %s258, %s261
      %p267 = scmp.eq.s32.totalorder %s23, 0
      %p268 = por %p266, %p267
      %p269 = scmp.ne.s32.totalorder %s258, %s261
      %p270 = scmp.eq.s32.totalorder %s28, 1
      %p271 = por %p269, %p270
      %p272 = scmp.ne.s32.totalorder %s261, %s262
      %p273 = scmp.eq.s32.totalorder %s28, 0
      %p274 = por %p272, %p273
      %p275 = scmp.ne.s32.totalorder %s261, %s262
      %p276 = scmp.eq.s32.totalorder %s29, 1
      %p277 = por %p275, %p276
      %p279 = scmp.ne.s32.totalorder %s262, %s278
      %p280 = scmp.eq.s32.totalorder %s29, 0
      %p281 = por %p279, %p280
      %p282 = scmp.le.s32.totalorder 1, %s23
      %p283 = scmp.lt.s32.totalorder %s23, 3
      %p284 = pnand %p282, %p283
      %p285 = pneg %p284
      // Predicated region
      $region9: #{tpu_custom_call.1} parent=5 // pred_check
        _
      $region10: #{tpu_custom_call.1} parent=5 // pred_check_branch
        %287 = sbr.rel (%p284) target = $region12
      $region11: #{tpu_custom_call.1} parent=5 // pred_region
        %s288 = ssub.s32 %s23, 1
        // Predicated region
        $region13: #{tpu_custom_call.1} parent=11 // pred_check
          %p289 = pneg %p96
        $region14: #{tpu_custom_call.1} parent=11 // pred_check_branch
          %291 = sbr.rel (%p289) target = $region16
        $region15: #{tpu_custom_call.1} parent=11 // pred_region
          _
        $region16: #{tpu_custom_call.1} parent=11 // pred_fallthru
          _
        // Predicated region
        $region17: #{tpu_custom_call.1} parent=11 // pred_check
          %p292 = pneg %p117
        $region18: #{tpu_custom_call.1} parent=11 // pred_check_branch
          %294 = sbr.rel (%p292) target = $region20
        $region19: #{tpu_custom_call.1} parent=11 // pred_region
          _
        $region20: #{tpu_custom_call.1} parent=11 // pred_fallthru
          _
        // Predicated region
        $region21: #{tpu_custom_call.1} parent=11 // pred_check
          %p295 = pneg %p138
        $region22: #{tpu_custom_call.1} parent=11 // pred_check_branch
          %297 = sbr.rel (%p295) target = $region24
        $region23: #{tpu_custom_call.1} parent=11 // pred_region
          _
        $region24: #{tpu_custom_call.1} parent=11 // pred_fallthru
          _
        // Predicated region
        $region25: #{tpu_custom_call.1} parent=11 // pred_check
          %p298 = pneg %p159
        $region26: #{tpu_custom_call.1} parent=11 // pred_check_branch
          %300 = sbr.rel (%p298) target = $region28
        $region27: #{tpu_custom_call.1} parent=11 // pred_region
          _
        $region28: #{tpu_custom_call.1} parent=11 // pred_fallthru
          _
        // Predicated region
        $region29: #{tpu_custom_call.1} parent=11 // pred_check
          %p301 = pneg %p180
        $region30: #{tpu_custom_call.1} parent=11 // pred_check_branch
          %303 = sbr.rel (%p301) target = $region32
        $region31: #{tpu_custom_call.1} parent=11 // pred_region
          _
        $region32: #{tpu_custom_call.1} parent=11 // pred_fallthru
          _
        // Predicated region
        $region33: #{tpu_custom_call.1} parent=11 // pred_check
          %p304 = pneg %p201
        $region34: #{tpu_custom_call.1} parent=11 // pred_check_branch
          %306 = sbr.rel (%p304) target = $region36
        $region35: #{tpu_custom_call.1} parent=11 // pred_region
          _
        $region36: #{tpu_custom_call.1} parent=11 // pred_fallthru
          _
        // Predicated region
        $region37: #{tpu_custom_call.1} parent=11 // pred_check
          %p307 = pneg %p222
        $region38: #{tpu_custom_call.1} parent=11 // pred_check_branch
          %309 = sbr.rel (%p307) target = $region40
        $region39: #{tpu_custom_call.1} parent=11 // pred_region
          _
        $region40: #{tpu_custom_call.1} parent=11 // pred_fallthru
          _
      $region12: #{tpu_custom_call.1} parent=5 // pred_fallthru
        _
      %p310 = scmp.lt.s32.totalorder %s23, 2
      // Predicated region
      $region41: #{tpu_custom_call.1} parent=5 // pred_check
        %p311 = pneg %p310
      $region42: #{tpu_custom_call.1} parent=5 // pred_check_branch
        %313 = sbr.rel (%p311) target = $region44
      $region43: #{tpu_custom_call.1} parent=5 // pred_region
        // Predicated region
        $region45: #{tpu_custom_call.1} parent=43 // pred_check
          %p314 = pneg %p43
        $region46: #{tpu_custom_call.1} parent=43 // pred_check_branch
          %316 = sbr.rel (%p314) target = $region48
        $region47: #{tpu_custom_call.1} parent=43 // pred_region
          %s317 = smul.u32 2, %s23
          %p318 = scmp.lt.s32.totalorder %s317, 3
          %s319 = scalar_select %p318, %s317, 3
          %s320 = smul.addr %s319, 8
          %s321 = scalar_lea.vmem %s0, %s320
          %s322 = smul.u32 2, %s23
        $region48: #{tpu_custom_call.1} parent=43 // pred_fallthru
          _
        // Predicated region
        $region49: #{tpu_custom_call.1} parent=43 // pred_check
          %p323 = pneg %p69
        $region50: #{tpu_custom_call.1} parent=43 // pred_check_branch
          %325 = sbr.rel (%p323) target = $region52
        $region51: #{tpu_custom_call.1} parent=43 // pred_region
          %p326 = scmp.lt.s32.totalorder %s23, 1
          %s327 = scalar_select %p326, %s23, 1
          %s328 = scalar_lea.vmem %s1, %s327
        $region52: #{tpu_custom_call.1} parent=43 // pred_fallthru
          _
      $region44: #{tpu_custom_call.1} parent=5 // pred_fallthru
        _
      %p329 = scmp.le.s32.totalorder 1, %s23
      %p330 = scmp.lt.s32.totalorder %s23, 3
      %p331 = pnand %p329, %p330
      %p332 = pneg %p331
      // Predicated region
      $region53: #{tpu_custom_call.1} parent=5 // pred_check
        _
      $region54: #{tpu_custom_call.1} parent=5 // pred_check_branch
        %334 = sbr.rel (%p331) target = $region56
      $region55: #{tpu_custom_call.1} parent=5 // pred_region
        %s335 = ssub.s32 %s23, 1
        %s336 = smul.u32 2, %s28
        %p337 = scmp.lt.s32.totalorder %s336, 3
        %s338 = scalar_select %p337, %s336, 3
        %s339 = smul.addr %s338, 8
        %s340 = scalar_lea.vmem %s0, %s339
        %p341 = pneg %p49
        %p342 = pneg %p46
        %p343 = scmp.lt.s32.totalorder %s28, 1
        %s344 = scalar_select %p343, %s28, 1
        %s345 = scalar_lea.vmem %s1, %s344
        %p346 = pneg %p75
        %p347 = pneg %p72
        %p348 = pneg %p96
        %p349 = pneg %p93
        %p350 = pneg %p117
        %p351 = pneg %p114
        %p352 = pneg %p138
        %p353 = pneg %p135
        %p354 = pneg %p159
        %p355 = pneg %p156
        %p356 = pneg %p180
        %p357 = pneg %p177
        %p358 = pneg %p201
        %p359 = pneg %p198
        %p360 = pneg %p222
        %p361 = pneg %p219
        %p362 = pneg %p248
        %p363 = pneg %p245
        %s364 = sand.u32 %s235, 1
        %s365 = scalar_lea.sflag [#allocation3], %s364
        %s366 = sand.u32 %s235, 1
        %s367 = smul.addr %s366, 16
        %s368 = scalar_lea.vmem [#allocation2], %s367
        %p369 = pneg %p274
        %p370 = pneg %p271
        %s371 = sand.u32 %s261, 1
        %s372 = scalar_lea.sflag [#allocation5], %s371
        %s373 = sand.u32 %s261, 1
        %s374 = smul.addr %s373, 16
        %s375 = scalar_lea.vmem [#allocation4], %s374
        %s376 = smul.u32 2, %s28
        %p377 = scmp.lt.s32.totalorder %s376, 3
        %s378 = scalar_select %p377, %s376, 3
        %s379 = smul.addr %s378, 8
        %s380 = scalar_lea.vmem %s0, %s379
        %s381 = smul.u32 2, %s28
        %p382 = scmp.lt.s32.totalorder %s28, 1
        %s383 = scalar_select %p382, %s28, 1
        %s384 = scalar_lea.vmem %s1, %s383
        %s385 = smul.u32 2, %s28
        %s386 = smul.u32 2, %s28
        %v388 = vlaneseq
        %v389 = vshrl.u32 %v388, 7
        %v390 = vadd.s32 %v389, 8
        %vm391 = vcmp.lt.s32.totalorder %v389, 0
        %v392 = vsub.s32 0, %v389
        %v393 = vsel %vm391, %v392, %v389
        %v394 = vshrl.u32 %v393, 4
        %v395 = vand.u32 %v393, 15
        %v396 = vsub.s32 0, %v395
        %v397 = vsel %vm391, %v396, %v395
        %vm398 = vcmp.lt.s32.totalorder %v390, 0
        %v399 = vsub.s32 0, %v390
        %v400 = vsel %vm398, %v399, %v390
        %v401 = vshrl.u32 %v400, 4
        %v402 = vand.u32 %v400, 15
        %v403 = vsub.s32 0, %v402
        %v404 = vsel %vm398, %v403, %v402
        %vm405 = vcmp.ne.s32.totalorder %v397, 0
        %vm406 = vcmp.ne.s32.totalorder %v404, 0
        %vm407 = vcmp.lt.s32.totalorder %v397, 0
        %vm408 = vcmp.lt.s32.totalorder %v404, 0
        %vm409 = vmand %vm407, %vm405
        %vm410 = vmand %vm408, %vm406
        %v411 = vadd.s32 %v397, 16
        %v412 = vadd.s32 %v404, 16
        %v413 = vsel %vm409, %v411, %v397
        %v414 = vsel %vm410, %v412, %v404
        %vm415 = vcmp.ge.s32.totalorder %v413, 2
        %vm416 = vcmp.ge.s32.totalorder %v414, 2
        %vm417 = vcmp.ge.s32.totalorder %v413, 1
        %vm418 = vcmp.ge.s32.totalorder %v414, 1
        %vm419 = vcmp.lt.s32.totalorder %v413, 15
        %vm420 = vcmp.lt.s32.totalorder %v414, 15
        %vm421 = vcmp.lt.s32.totalorder %v413, 14
        %vm422 = vcmp.lt.s32.totalorder %v414, 14
        %v423 = vlaneseq
        %v424 = vand.u32 %v423, 127
        %v425 = vld [vmem:[%s380] sm:$0xff]
        %v426 = vld [vmem:[%s380 + $0x8] sm:$0xff]
        %427 = vset.pattern.permute.xlu0 0
        %428 = vperm.xlu0 %427, %v425
        %v429 = vpop.permute.xlu0 %428
        %430 = vset.pattern.permute.xlu0 0
        %431 = vperm.xlu0 %430, %v426
        %v432 = vpop.permute.xlu0 %431
        %vm433 = vcmp.eq.s32.totalorder %v424, %v429
        %vm434 = vcmp.eq.s32.totalorder %v424, %v432
        %v435 = vsel %vm433, 1, 0
        %v436 = vsel %vm434, 1, 0
        %v437 = vcvt.s32.f32 %v435
        %v438 = vcvt.s32.f32 %v436
        %v439 = vpack.c.bf16 %v438, %v437
        %v440 = vld [vmem:[%s2] sm:$0xf]
        %v441 = vld [vmem:[%s2 + $0x4] sm:$0xf]
        %v442 = vld [vmem:[%s2 + $0x8] sm:$0xf]
        %v443 = vld [vmem:[%s2 + $0xc] sm:$0xf]
        %v444 = vld [vmem:[%s2 + $0x10] sm:$0xf]
        %v445 = vld [vmem:[%s2 + $0x14] sm:$0xf]
        %v446 = vld [vmem:[%s2 + $0x18] sm:$0xf]
        %v447 = vld [vmem:[%s2 + $0x1c] sm:$0xf]
        %v456 = vunpack.c.l.b16 %v440
        %v457 = vunpack.c.l.b16 %v441
        %v458 = vunpack.c.l.b16 %v442
        %v459 = vunpack.c.l.b16 %v443
        %v460 = vunpack.c.l.b16 %v444
        %v461 = vunpack.c.l.b16 %v445
        %v462 = vunpack.c.l.b16 %v446
        %v463 = vunpack.c.l.b16 %v447
        %v464 = vpack.c.b16 %v457, %v456
        %v465 = vpack.c.b16 %v459, %v458
        %v466 = vpack.c.b16 %v461, %v460
        %v467 = vpack.c.b16 %v463, %v462
        %vm472 = vcmask 523264
        %v474 = vsel %vm472, %v439, 0
        %476 = vmatprep.subr.bf16.mxu0 0
        %477 = vmatpush1.bf16.msra.mxu0 0
        %478 = vmatprep.subr.bf16.mxu0 0
        %479 = vmatpush1.bf16.msra.mxu0 0
        %480 = vmatprep.subr.bf16.mxu0 0
        %481 = vmatpush1.bf16.msra.mxu0 0
        %482 = vmatprep.subr.bf16.mxu0 0
        %483 = vmatpush1.bf16.msra.mxu0 0
        %484 = vmatprep.subr.bf16.mxu0 0
        %485 = vmatpush1.bf16.msra.mxu0 %v467
        %486 = vmatprep.subr.bf16.mxu0 0
        %487 = vmatpush1.bf16.msra.mxu0 %v466
        %488 = vmatprep.subr.bf16.mxu0 0
        %489 = vmatpush1.bf16.msra.mxu0 %v465
        %490 = vmatprep.subr.bf16.mxu0 0
        %491 = vmatpush1.bf16.msra.mxu0 %v464
        %492 = vmatprep.subr.bf16.mxu0 0
        %493 = vmatpush2.bf16.msra.mxu0 0
        %494 = vmatprep.subr.bf16.mxu0 0
        %495 = vmatpush2.bf16.msra.mxu0 0
        %496 = vmatprep.subr.bf16.mxu0 0
        %497 = vmatpush2.bf16.msra.mxu0 0
        %498 = vmatprep.subr.bf16.mxu0 0
        %499 = vmatpush2.bf16.msra.mxu0 0
        %500 = vmatprep.subr.bf16.mxu0 0
        %501 = vmatpush2.bf16.msra.mxu0 0
        %502 = vmatprep.subr.bf16.mxu0 0
        %503 = vmatpush2.bf16.msra.mxu0 0
        %504 = vmatprep.subr.bf16.mxu0 0
        %505 = vmatpush2.bf16.msra.mxu0 0
        %506 = vmatprep.subr.bf16.mxu0 0
        %507 = vmatpush2.bf16.msra.mxu0 0
        %508 = vmatprep.mubr.bf16.mxu0 0
        %509 = vmatmul.mubr.bf16.gmra.mxu0 %v474
        %v510 = vpop.f32.mrf.mxu0
        %v511 = vadd.f32 0.0, %v510
        %v512 = vpop.f32.mrf.mxu0
        %v513 = vpop.f32.mrf.mxu0
        %v514 = vadd.f32 0.0, %v513
        %v515 = vpop.f32.mrf.mxu0
        %516 = vdwg.mxu0
        %v517 = vld [vmem:[%s384] sm:$0x1]
        %v519 = vlaneseq
        %v520 = vshrl.u32 %v519, 7
        %v521 = vsub.s32 0, %v520
        %v522 = vrot.slane %v517, %v521
        %523 = vrot.lane.b32.xlu0 %v522, 32
        %v524 = vpop.permute.xlu0 %523
        %vm526 = vcmask 261120
        %v527 = vsel %vm526, %v511, %v524
        %v528 = vsel %vm526, %v514, %v524
        %vm529 = vcmask 343040
        %530 = vst.msk [vmem:[%s368] sm:$0xff] %vm529, %v527
        %531 = vst.msk [vmem:[%s368 + $0x8] sm:$0xff] %vm529, %v528
        %v532 = vrot.slane %v527, 6
        %v533 = vrot.slane %v528, 6
        %vm534 = vcmp.lt.s32.totalorder %v389, 2
        %v535 = vsel %vm534, %v532, %v533
        %v536 = vsel %vm534, %v533, %v532
        %v537 = vsel %vm415, 1, 0
        %v538 = vsel %vm416, 1, 0
        %vm539 = vcmp.eq.s32.totalorder %v537, 1
        %vm540 = vcmp.eq.s32.totalorder %v538, 1
        %v541 = vsel %vm539, %v536, 0.0
        %v542 = vsel %vm540, %v535, 0.0
        %v543 = vrot.slane %v527, 7
        %v544 = vrot.slane %v528, 7
        %vm545 = vcmp.lt.s32.totalorder %v389, 1
        %v546 = vsel %vm545, %v543, %v544
        %v547 = vsel %vm545, %v544, %v543
        %v548 = vsel %vm417, 1, 0
        %v549 = vsel %vm418, 1, 0
        %vm550 = vcmp.eq.s32.totalorder %v548, 1
        %vm551 = vcmp.eq.s32.totalorder %v549, 1
        %v552 = vsel %vm550, %v547, 0.0
        %v553 = vsel %vm551, %v546, 0.0
        %v554 = vrot.slane %v527, 1
        %v555 = vrot.slane %v528, 1
        %vm556 = vcmp.lt.s32.totalorder %v389, 7
        %v557 = vsel %vm556, %v554, %v555
        %v558 = vsel %vm556, %v555, %v554
        %v559 = vsel %vm419, 1, 0
        %v560 = vsel %vm420, 1, 0
        %vm561 = vcmp.eq.s32.totalorder %v559, 1
        %vm562 = vcmp.eq.s32.totalorder %v560, 1
        %v563 = vsel %vm561, %v557, 0.0
        %v564 = vsel %vm562, %v558, 0.0
        %v565 = vrot.slane %v527, 2
        %v566 = vrot.slane %v528, 2
        %vm567 = vcmp.lt.s32.totalorder %v389, 6
        %v568 = vsel %vm567, %v565, %v566
        %v569 = vsel %vm567, %v566, %v565
        %v570 = vsel %vm421, 1, 0
        %v571 = vsel %vm422, 1, 0
        %vm572 = vcmp.eq.s32.totalorder %v570, 1
        %vm573 = vcmp.eq.s32.totalorder %v571, 1
        %v574 = vsel %vm572, %v568, 0.0
        %v575 = vsel %vm573, %v569, 0.0
        %578 = vrot.lane.b32.xlu0 %v552, 42
        %v579 = vpop.permute.xlu0 %578
        %580 = vrot.lane.b32.xlu0 %v553, 42
        %v581 = vpop.permute.xlu0 %580
        %586 = vrot.lane.b32.xlu0 %v527, 84
        %v587 = vpop.permute.xlu0 %586
        %588 = vrot.lane.b32.xlu0 %v528, 84
        %v589 = vpop.permute.xlu0 %588
        %594 = vrot.lane.b32.xlu0 %v563, 126
        %v595 = vpop.permute.xlu0 %594
        %596 = vrot.lane.b32.xlu0 %v564, 126
        %v597 = vpop.permute.xlu0 %596
        %602 = vrot.lane.b32.xlu0 %v574, 40
        %v603 = vpop.permute.xlu0 %602
        %604 = vrot.lane.b32.xlu0 %v575, 40
        %v605 = vpop.permute.xlu0 %604
        %v608 = vsel %vm529, %v541, %v579
        %v609 = vsel %vm529, %v542, %v581
        %vm610 = vcmask 687104
        %v611 = vsel %vm610, %v608, %v587
        %v612 = vsel %vm610, %v609, %v589
        %vm613 = vcmask 1031168
        %v614 = vsel %vm613, %v611, %v595
        %v615 = vsel %vm613, %v612, %v597
        %vm616 = vcmask 326656
        %v617 = vsel %vm616, %v595, %v603
        %v618 = vsel %vm616, %v597, %v605
        %v619 = vpack.c.bf16 %v615, %v614
        %v620 = vpack.c.bf16 %v618, %v617
        %v621 = vld [vmem:[%s3] sm:$0xf]
        %v622 = vld [vmem:[%s3 + $0x4] sm:$0xf]
        %v623 = vld [vmem:[%s3 + $0x8] sm:$0xf]
        %v624 = vld [vmem:[%s3 + $0xc] sm:$0xf]
        %v625 = vld [vmem:[%s3 + $0x10] sm:$0xf]
        %v626 = vld [vmem:[%s3 + $0x14] sm:$0xf]
        %v627 = vld [vmem:[%s3 + $0x18] sm:$0xf]
        %v628 = vld [vmem:[%s3 + $0x1c] sm:$0xf]
        %v629 = vld [vmem:[%s3 + $0x20] sm:$0xf]
        %v630 = vld [vmem:[%s3 + $0x24] sm:$0xf]
        %v631 = vld [vmem:[%s3 + $0x28] sm:$0xf]
        %v632 = vld [vmem:[%s3 + $0x2c] sm:$0xf]
        %v633 = vld [vmem:[%s3 + $0x30] sm:$0xf]
        %v634 = vld [vmem:[%s3 + $0x34] sm:$0xf]
        %v635 = vld [vmem:[%s3 + $0x38] sm:$0xf]
        %v636 = vld [vmem:[%s3 + $0x3c] sm:$0xf]
        %v637 = vld [vmem:[%s3 + $0x40] sm:$0xf]
        %v638 = vld [vmem:[%s3 + $0x44] sm:$0xf]
        %v639 = vld [vmem:[%s3 + $0x48] sm:$0xf]
        %v640 = vld [vmem:[%s3 + $0x4c] sm:$0xf]
        %v641 = vld [vmem:[%s3 + $0x50] sm:$0xf]
        %v642 = vld [vmem:[%s3 + $0x54] sm:$0xf]
        %v643 = vld [vmem:[%s3 + $0x58] sm:$0xf]
        %v644 = vld [vmem:[%s3 + $0x5c] sm:$0xf]
        %v645 = vld [vmem:[%s3 + $0x60] sm:$0xf]
        %v646 = vld [vmem:[%s3 + $0x64] sm:$0xf]
        %v647 = vld [vmem:[%s3 + $0x68] sm:$0x1]
        %v648 = vld [vmem:[%s4] sm:$0x1]
        %v650 = vlaneseq
        %v651 = vshrl.u32 %v650, 7
        %v652 = vsub.s32 0, %v651
        %v653 = vrot.slane %v648, %v652
        %v682 = vunpack.c.l.b16 %v621
        %v683 = vunpack.c.l.b16 %v622
        %v684 = vunpack.c.l.b16 %v623
        %v685 = vunpack.c.l.b16 %v624
        %v686 = vunpack.c.l.b16 %v625
        %v687 = vunpack.c.l.b16 %v626
        %v688 = vunpack.c.l.b16 %v627
        %v689 = vunpack.c.l.b16 %v628
        %v690 = vunpack.c.l.b16 %v629
        %v691 = vunpack.c.l.b16 %v630
        %v692 = vunpack.c.l.b16 %v631
        %v693 = vunpack.c.l.b16 %v632
        %v694 = vunpack.c.l.b16 %v633
        %v695 = vunpack.c.l.b16 %v634
        %v696 = vunpack.c.l.b16 %v635
        %v697 = vunpack.c.l.b16 %v636
        %v698 = vunpack.c.l.b16 %v637
        %v699 = vunpack.c.l.b16 %v638
        %v700 = vunpack.c.l.b16 %v639
        %v701 = vunpack.c.l.b16 %v640
        %v702 = vunpack.c.l.b16 %v641
        %v703 = vunpack.c.l.b16 %v642
        %v704 = vunpack.c.l.b16 %v643
        %v705 = vunpack.c.l.b16 %v644
        %v706 = vunpack.c.l.b16 %v645
        %v707 = vunpack.c.l.b16 %v646
        %v708 = vunpack.c.l.b16 %v647
        %v709 = vpack.c.b16 %v683, %v682
        %v710 = vpack.c.b16 %v685, %v684
        %v711 = vpack.c.b16 %v687, %v686
        %v712 = vpack.c.b16 %v689, %v688
        %v713 = vpack.c.b16 %v691, %v690
        %v714 = vpack.c.b16 %v693, %v692
        %v715 = vpack.c.b16 %v695, %v694
        %v716 = vpack.c.b16 %v697, %v696
        %v717 = vpack.c.b16 %v699, %v698
        %v718 = vpack.c.b16 %v701, %v700
        %v719 = vpack.c.b16 %v703, %v702
        %v720 = vpack.c.b16 %v705, %v704
        %v721 = vpack.c.b16 %v707, %v706
        %v722 = vpack.c.b16 %v708, %v708
        %vm736 = vcmask 670720
        %v738 = vsel %vm736, %v620, 0
        %vm740 = vcmask 1040384
        %v742 = vsel %vm740, %v722, 0
        %744 = vmatprep.subr.bf16.mxu0 0
        %745 = vmatpush1.bf16.msra.mxu0 %v716
        %746 = vmatprep.subr.bf16.mxu0 0
        %747 = vmatpush1.bf16.msra.mxu0 %v715
        %748 = vmatprep.subr.bf16.mxu0 0
        %749 = vmatpush1.bf16.msra.mxu0 %v714
        %750 = vmatprep.subr.bf16.mxu0 0
        %751 = vmatpush1.bf16.msra.mxu0 %v713
        %752 = vmatprep.subr.bf16.mxu0 0
        %753 = vmatpush1.bf16.msra.mxu0 %v712
        %754 = vmatprep.subr.bf16.mxu0 0
        %755 = vmatpush1.bf16.msra.mxu0 %v711
        %756 = vmatprep.subr.bf16.mxu0 0
        %757 = vmatpush1.bf16.msra.mxu0 %v710
        %758 = vmatprep.subr.bf16.mxu0 0
        %759 = vmatpush1.bf16.msra.mxu0 %v709
        %760 = vmatprep.subr.bf16.mxu0 0
        %761 = vmatpush2.bf16.msra.mxu0 0
        %762 = vmatprep.subr.bf16.mxu0 0
        %763 = vmatpush2.bf16.msra.mxu0 0
        %764 = vmatprep.subr.bf16.mxu0 0
        %765 = vmatpush2.bf16.msra.mxu0 %v742
        %766 = vmatprep.subr.bf16.mxu0 0
        %767 = vmatpush2.bf16.msra.mxu0 %v721
        %768 = vmatprep.subr.bf16.mxu0 0
        %769 = vmatpush2.bf16.msra.mxu0 %v720
        %770 = vmatprep.subr.bf16.mxu0 0
        %771 = vmatpush2.bf16.msra.mxu0 %v719
        %772 = vmatprep.subr.bf16.mxu0 0
        %773 = vmatpush2.bf16.msra.mxu0 %v718
        %774 = vmatprep.subr.bf16.mxu0 0
        %775 = vmatpush2.bf16.msra.mxu0 %v717
        %776 = vmatprep.mubr.bf16.mxu0 %v738
        %777 = vmatmul.mubr.bf16.gmra.mxu0 %v619
        %v778 = vpop.f32.mrf.mxu0
        %v779 = vadd.f32 %v653, %v778
        %v780 = vpop.f32.mrf.mxu0
        %v781 = vpop.f32.mrf.mxu0
        %v782 = vadd.f32 %v653, %v781
        %v783 = vpop.f32.mrf.mxu0
        %784 = vdwg.mxu0
        %v785 = vmax.f32 %v779, 0.0
        %v786 = vmax.f32 %v782, 0.0
        %v787 = vrot.slane %v785, 6
        %v788 = vrot.slane %v786, 6
        %v789 = vsel %vm534, %v787, %v788
        %v790 = vsel %vm534, %v788, %v787
        %v791 = vsel %vm539, %v790, 0.0
        %v792 = vsel %vm540, %v789, 0.0
        %v793 = vrot.slane %v785, 7
        %v794 = vrot.slane %v786, 7
        %v795 = vsel %vm545, %v793, %v794
        %v796 = vsel %vm545, %v794, %v793
        %v797 = vsel %vm550, %v796, 0.0
        %v798 = vsel %vm551, %v795, 0.0
        %v799 = vrot.slane %v785, 1
        %v800 = vrot.slane %v786, 1
        %v801 = vsel %vm556, %v799, %v800
        %v802 = vsel %vm556, %v800, %v799
        %v803 = vsel %vm561, %v801, 0.0
        %v804 = vsel %vm562, %v802, 0.0
        %v805 = vrot.slane %v785, 2
        %v806 = vrot.slane %v786, 2
        %v807 = vsel %vm567, %v805, %v806
        %v808 = vsel %vm567, %v806, %v805
        %v809 = vsel %vm572, %v807, 0.0
        %v810 = vsel %vm573, %v808, 0.0
        %813 = vrot.lane.b32.xlu0 %v797, 32
        %v814 = vpop.permute.xlu0 %813
        %815 = vrot.lane.b32.xlu0 %v798, 32
        %v816 = vpop.permute.xlu0 %815
        %821 = vrot.lane.b32.xlu0 %v785, 64
        %v822 = vpop.permute.xlu0 %821
        %823 = vrot.lane.b32.xlu0 %v786, 64
        %v824 = vpop.permute.xlu0 %823
        %829 = vrot.lane.b32.xlu0 %v803, 96
        %v830 = vpop.permute.xlu0 %829
        %831 = vrot.lane.b32.xlu0 %v804, 96
        %v832 = vpop.permute.xlu0 %831
        %v835 = vsel %vm526, %v791, %v814
        %v836 = vsel %vm526, %v792, %v816
        %v837 = vsel %vm472, %v835, %v822
        %v838 = vsel %vm472, %v836, %v824
        %vm839 = vcmask 785408
        %v840 = vsel %vm839, %v837, %v830
        %v841 = vsel %vm839, %v838, %v832
        %v842 = vpack.c.bf16 %v841, %v840
        %v843 = vpack.c.bf16 %v810, %v809
        %v844 = vld [vmem:[%s5] sm:$0xf]
        %v845 = vld [vmem:[%s5 + $0x4] sm:$0xf]
        %v846 = vld [vmem:[%s5 + $0x8] sm:$0xf]
        %v847 = vld [vmem:[%s5 + $0xc] sm:$0xf]
        %v848 = vld [vmem:[%s5 + $0x10] sm:$0xf]
        %v849 = vld [vmem:[%s5 + $0x14] sm:$0xf]
        %v850 = vld [vmem:[%s5 + $0x18] sm:$0xf]
        %v851 = vld [vmem:[%s5 + $0x1c] sm:$0xf]
        %v852 = vld [vmem:[%s5 + $0x20] sm:$0xf]
        %v853 = vld [vmem:[%s5 + $0x24] sm:$0xf]
        %v854 = vld [vmem:[%s5 + $0x28] sm:$0xf]
        %v855 = vld [vmem:[%s5 + $0x2c] sm:$0xf]
        %v856 = vld [vmem:[%s5 + $0x30] sm:$0xf]
        %v857 = vld [vmem:[%s5 + $0x34] sm:$0xf]
        %v858 = vld [vmem:[%s5 + $0x38] sm:$0xf]
        %v859 = vld [vmem:[%s5 + $0x3c] sm:$0xf]
        %v860 = vld [vmem:[%s5 + $0x40] sm:$0xf]
        %v861 = vld [vmem:[%s5 + $0x44] sm:$0xf]
        %v862 = vld [vmem:[%s5 + $0x48] sm:$0xf]
        %v863 = vld [vmem:[%s5 + $0x4c] sm:$0xf]
        %v864 = vld [vmem:[%s6] sm:$0x1]
        %v866 = vlaneseq
        %v867 = vshrl.u32 %v866, 7
        %v868 = vsub.s32 0, %v867
        %v869 = vrot.slane %v864, %v868
        %v891 = vunpack.c.l.b16 %v844
        %v892 = vunpack.c.l.b16 %v845
        %v893 = vunpack.c.l.b16 %v846
        %v894 = vunpack.c.l.b16 %v847
        %v895 = vunpack.c.l.b16 %v848
        %v896 = vunpack.c.l.b16 %v849
        %v897 = vunpack.c.l.b16 %v850
        %v898 = vunpack.c.l.b16 %v851
        %v899 = vunpack.c.l.b16 %v852
        %v900 = vunpack.c.l.b16 %v853
        %v901 = vunpack.c.l.b16 %v854
        %v902 = vunpack.c.l.b16 %v855
        %v903 = vunpack.c.l.b16 %v856
        %v904 = vunpack.c.l.b16 %v857
        %v905 = vunpack.c.l.b16 %v858
        %v906 = vunpack.c.l.b16 %v859
        %v907 = vunpack.c.l.b16 %v860
        %v908 = vunpack.c.l.b16 %v861
        %v909 = vunpack.c.l.b16 %v862
        %v910 = vunpack.c.l.b16 %v863
        %v911 = vpack.c.b16 %v892, %v891
        %v912 = vpack.c.b16 %v894, %v893
        %v913 = vpack.c.b16 %v896, %v895
        %v914 = vpack.c.b16 %v898, %v897
        %v915 = vpack.c.b16 %v900, %v899
        %v916 = vpack.c.b16 %v902, %v901
        %v917 = vpack.c.b16 %v904, %v903
        %v918 = vpack.c.b16 %v906, %v905
        %v919 = vpack.c.b16 %v908, %v907
        %v920 = vpack.c.b16 %v910, %v909
        %v932 = vsel %vm526, %v843, 0
        %934 = vmatprep.subr.bf16.mxu0 0
        %935 = vmatpush1.bf16.msra.mxu0 %v918
        %936 = vmatprep.subr.bf16.mxu0 0
        %937 = vmatpush1.bf16.msra.mxu0 %v917
        %938 = vmatprep.subr.bf16.mxu0 0
        %939 = vmatpush1.bf16.msra.mxu0 %v916
        %940 = vmatprep.subr.bf16.mxu0 0
        %941 = vmatpush1.bf16.msra.mxu0 %v915
        %942 = vmatprep.subr.bf16.mxu0 0
        %943 = vmatpush1.bf16.msra.mxu0 %v914
        %944 = vmatprep.subr.bf16.mxu0 0
        %945 = vmatpush1.bf16.msra.mxu0 %v913
        %946 = vmatprep.subr.bf16.mxu0 0
        %947 = vmatpush1.bf16.msra.mxu0 %v912
        %948 = vmatprep.subr.bf16.mxu0 0
        %949 = vmatpush1.bf16.msra.mxu0 %v911
        %950 = vmatprep.subr.bf16.mxu0 0
        %951 = vmatpush2.bf16.msra.mxu0 0
        %952 = vmatprep.subr.bf16.mxu0 0
        %953 = vmatpush2.bf16.msra.mxu0 0
        %954 = vmatprep.subr.bf16.mxu0 0
        %955 = vmatpush2.bf16.msra.mxu0 0
        %956 = vmatprep.subr.bf16.mxu0 0
        %957 = vmatpush2.bf16.msra.mxu0 0
        %958 = vmatprep.subr.bf16.mxu0 0
        %959 = vmatpush2.bf16.msra.mxu0 0
        %960 = vmatprep.subr.bf16.mxu0 0
        %961 = vmatpush2.bf16.msra.mxu0 0
        %962 = vmatprep.subr.bf16.mxu0 0
        %963 = vmatpush2.bf16.msra.mxu0 %v920
        %964 = vmatprep.subr.bf16.mxu0 0
        %965 = vmatpush2.bf16.msra.mxu0 %v919
        %966 = vmatprep.mubr.bf16.mxu0 %v932
        %967 = vmatmul.mubr.bf16.gmra.mxu0 %v842
        %v968 = vpop.f32.mrf.mxu0
        %v969 = vadd.f32 %v869, %v968
        %v970 = vpop.f32.mrf.mxu0
        %v971 = vpop.f32.mrf.mxu0
        %v972 = vadd.f32 %v869, %v971
        %v973 = vpop.f32.mrf.mxu0
        %974 = vdwg.mxu0
        %v975 = vmax.f32 %v969, 0.0
        %v976 = vmax.f32 %v972, 0.0
        %v977 = vrot.slane %v975, 6
        %v978 = vrot.slane %v976, 6
        %v979 = vsel %vm534, %v977, %v978
        %v980 = vsel %vm534, %v978, %v977
        %v981 = vsel %vm539, %v980, 0.0
        %v982 = vsel %vm540, %v979, 0.0
        %v983 = vrot.slane %v975, 7
        %v984 = vrot.slane %v976, 7
        %v985 = vsel %vm545, %v983, %v984
        %v986 = vsel %vm545, %v984, %v983
        %v987 = vsel %vm550, %v986, 0.0
        %v988 = vsel %vm551, %v985, 0.0
        %v989 = vrot.slane %v975, 1
        %v990 = vrot.slane %v976, 1
        %v991 = vsel %vm556, %v989, %v990
        %v992 = vsel %vm556, %v990, %v989
        %v993 = vsel %vm561, %v991, 0.0
        %v994 = vsel %vm562, %v992, 0.0
        %v995 = vrot.slane %v975, 2
        %v996 = vrot.slane %v976, 2
        %v997 = vsel %vm567, %v995, %v996
        %v998 = vsel %vm567, %v996, %v995
        %v999 = vsel %vm572, %v997, 0.0
        %v1000 = vsel %vm573, %v998, 0.0
        %1003 = vrot.lane.b32.xlu0 %v987, 32
        %v1004 = vpop.permute.xlu0 %1003
        %1005 = vrot.lane.b32.xlu0 %v988, 32
        %v1006 = vpop.permute.xlu0 %1005
        %1011 = vrot.lane.b32.xlu0 %v975, 64
        %v1012 = vpop.permute.xlu0 %1011
        %1013 = vrot.lane.b32.xlu0 %v976, 64
        %v1014 = vpop.permute.xlu0 %1013
        %1019 = vrot.lane.b32.xlu0 %v993, 96
        %v1020 = vpop.permute.xlu0 %1019
        %1021 = vrot.lane.b32.xlu0 %v994, 96
        %v1022 = vpop.permute.xlu0 %1021
        %v1025 = vsel %vm526, %v981, %v1004
        %v1026 = vsel %vm526, %v982, %v1006
        %v1027 = vsel %vm472, %v1025, %v1012
        %v1028 = vsel %vm472, %v1026, %v1014
        %v1029 = vsel %vm839, %v1027, %v1020
        %v1030 = vsel %vm839, %v1028, %v1022
        %v1031 = vpack.c.bf16 %v1030, %v1029
        %v1032 = vpack.c.bf16 %v1000, %v999
        %v1033 = vld [vmem:[%s7] sm:$0xf]
        %v1034 = vld [vmem:[%s7 + $0x4] sm:$0xf]
        %v1035 = vld [vmem:[%s7 + $0x8] sm:$0xf]
        %v1036 = vld [vmem:[%s7 + $0xc] sm:$0xf]
        %v1037 = vld [vmem:[%s7 + $0x10] sm:$0xf]
        %v1038 = vld [vmem:[%s7 + $0x14] sm:$0xf]
        %v1039 = vld [vmem:[%s7 + $0x18] sm:$0xf]
        %v1040 = vld [vmem:[%s7 + $0x1c] sm:$0xf]
        %v1041 = vld [vmem:[%s7 + $0x20] sm:$0xf]
        %v1042 = vld [vmem:[%s7 + $0x24] sm:$0xf]
        %v1043 = vld [vmem:[%s7 + $0x28] sm:$0xf]
        %v1044 = vld [vmem:[%s7 + $0x2c] sm:$0xf]
        %v1045 = vld [vmem:[%s7 + $0x30] sm:$0xf]
        %v1046 = vld [vmem:[%s7 + $0x34] sm:$0xf]
        %v1047 = vld [vmem:[%s7 + $0x38] sm:$0xf]
        %v1048 = vld [vmem:[%s7 + $0x3c] sm:$0xf]
        %v1049 = vld [vmem:[%s7 + $0x40] sm:$0xf]
        %v1050 = vld [vmem:[%s7 + $0x44] sm:$0xf]
        %v1051 = vld [vmem:[%s7 + $0x48] sm:$0xf]
        %v1052 = vld [vmem:[%s7 + $0x4c] sm:$0xf]
        %v1053 = vld [vmem:[%s8] sm:$0x1]
        %v1055 = vlaneseq
        %v1056 = vshrl.u32 %v1055, 7
        %v1057 = vsub.s32 0, %v1056
        %v1058 = vrot.slane %v1053, %v1057
        %v1080 = vunpack.c.l.b16 %v1033
        %v1081 = vunpack.c.l.b16 %v1034
        %v1082 = vunpack.c.l.b16 %v1035
        %v1083 = vunpack.c.l.b16 %v1036
        %v1084 = vunpack.c.l.b16 %v1037
        %v1085 = vunpack.c.l.b16 %v1038
        %v1086 = vunpack.c.l.b16 %v1039
        %v1087 = vunpack.c.l.b16 %v1040
        %v1088 = vunpack.c.l.b16 %v1041
        %v1089 = vunpack.c.l.b16 %v1042
        %v1090 = vunpack.c.l.b16 %v1043
        %v1091 = vunpack.c.l.b16 %v1044
        %v1092 = vunpack.c.l.b16 %v1045
        %v1093 = vunpack.c.l.b16 %v1046
        %v1094 = vunpack.c.l.b16 %v1047
        %v1095 = vunpack.c.l.b16 %v1048
        %v1096 = vunpack.c.l.b16 %v1049
        %v1097 = vunpack.c.l.b16 %v1050
        %v1098 = vunpack.c.l.b16 %v1051
        %v1099 = vunpack.c.l.b16 %v1052
        %v1100 = vpack.c.b16 %v1081, %v1080
        %v1101 = vpack.c.b16 %v1083, %v1082
        %v1102 = vpack.c.b16 %v1085, %v1084
        %v1103 = vpack.c.b16 %v1087, %v1086
        %v1104 = vpack.c.b16 %v1089, %v1088
        %v1105 = vpack.c.b16 %v1091, %v1090
        %v1106 = vpack.c.b16 %v1093, %v1092
        %v1107 = vpack.c.b16 %v1095, %v1094
        %v1108 = vpack.c.b16 %v1097, %v1096
        %v1109 = vpack.c.b16 %v1099, %v1098
        %v1121 = vsel %vm526, %v1032, 0
        %1123 = vmatprep.subr.bf16.mxu0 0
        %1124 = vmatpush1.bf16.msra.mxu0 %v1107
        %1125 = vmatprep.subr.bf16.mxu0 0
        %1126 = vmatpush1.bf16.msra.mxu0 %v1106
        %1127 = vmatprep.subr.bf16.mxu0 0
        %1128 = vmatpush1.bf16.msra.mxu0 %v1105
        %1129 = vmatprep.subr.bf16.mxu0 0
        %1130 = vmatpush1.bf16.msra.mxu0 %v1104
        %1131 = vmatprep.subr.bf16.mxu0 0
        %1132 = vmatpush1.bf16.msra.mxu0 %v1103
        %1133 = vmatprep.subr.bf16.mxu0 0
        %1134 = vmatpush1.bf16.msra.mxu0 %v1102
        %1135 = vmatprep.subr.bf16.mxu0 0
        %1136 = vmatpush1.bf16.msra.mxu0 %v1101
        %1137 = vmatprep.subr.bf16.mxu0 0
        %1138 = vmatpush1.bf16.msra.mxu0 %v1100
        %1139 = vmatprep.subr.bf16.mxu0 0
        %1140 = vmatpush2.bf16.msra.mxu0 0
        %1141 = vmatprep.subr.bf16.mxu0 0
        %1142 = vmatpush2.bf16.msra.mxu0 0
        %1143 = vmatprep.subr.bf16.mxu0 0
        %1144 = vmatpush2.bf16.msra.mxu0 0
        %1145 = vmatprep.subr.bf16.mxu0 0
        %1146 = vmatpush2.bf16.msra.mxu0 0
        %1147 = vmatprep.subr.bf16.mxu0 0
        %1148 = vmatpush2.bf16.msra.mxu0 0
        %1149 = vmatprep.subr.bf16.mxu0 0
        %1150 = vmatpush2.bf16.msra.mxu0 0
        %1151 = vmatprep.subr.bf16.mxu0 0
        %1152 = vmatpush2.bf16.msra.mxu0 %v1109
        %1153 = vmatprep.subr.bf16.mxu0 0
        %1154 = vmatpush2.bf16.msra.mxu0 %v1108
        %1155 = vmatprep.mubr.bf16.mxu0 %v1121
        %1156 = vmatmul.mubr.bf16.gmra.mxu0 %v1031
        %v1157 = vpop.f32.mrf.mxu0
        %v1158 = vadd.f32 %v1058, %v1157
        %v1159 = vpop.f32.mrf.mxu0
        %v1160 = vpop.f32.mrf.mxu0
        %v1161 = vadd.f32 %v1058, %v1160
        %v1162 = vpop.f32.mrf.mxu0
        %1163 = vdwg.mxu0
        %1164 = vst.msk [vmem:[%s375] sm:$0xff] %vm526, %v1158
        %1165 = vst.msk [vmem:[%s375 + $0x8] sm:$0xff] %vm526, %v1161
        %s1166 = sand.u32 %s235, 1
        %s1167 = scalar_lea.sflag [#allocation3], %s1166
        %s1168 = sand.u32 %s235, 1
        %s1169 = smul.addr %s1168, 16
        %s1170 = scalar_lea.vmem [#allocation2], %s1169
        %s1171 = sand.u32 %s261, 1
        %s1172 = scalar_lea.sflag [#allocation5], %s1171
        %s1173 = sand.u32 %s261, 1
        %s1174 = smul.addr %s1173, 16
        %s1175 = scalar_lea.vmem [#allocation4], %s1174
        // Predicated region
        $region57: #{tpu_custom_call.1} parent=55 // pred_check
          %p1176 = pneg %p245
        $region58: #{tpu_custom_call.1} parent=55 // pred_check_branch
          %1178 = sbr.rel (%p1176) target = $region60
        $region59: #{tpu_custom_call.1} parent=55 // pred_region
          %s1179 = smul.u32 2, %s28
          %s1181 = ssub.s32 256, 256
          %1182 = vsyncadd %s1167, %s1181
          %s1183 = smul.addr %s1179, 128
          %s1184 = scalar_lea.hbm %s9, %s1183
          %s1185 = sshll.u32 %s1170, 4
          %s1186 = int_to_ptr.vmem [resolvable:$true] %s1185
          %1191 = dma.vmem_to_hbm [thread:$0]  %s1186, 256, %s1184, %s1167, 128, 128, 8
        $region60: #{tpu_custom_call.1} parent=55 // pred_fallthru
          _
        // Predicated region
        $region61: #{tpu_custom_call.1} parent=55 // pred_check
          %p1192 = pneg %p271
        $region62: #{tpu_custom_call.1} parent=55 // pred_check_branch
          %1194 = sbr.rel (%p1192) target = $region64
        $region63: #{tpu_custom_call.1} parent=55 // pred_region
          %s1195 = smul.u32 2, %s28
          %s1197 = ssub.s32 256, 256
          %1198 = vsyncadd %s1172, %s1197
          %s1199 = smul.addr %s1195, 128
          %s1200 = scalar_lea.hbm %s10, %s1199
          %s1201 = sshll.u32 %s1175, 4
          %s1202 = int_to_ptr.vmem [resolvable:$true] %s1201
          %1207 = dma.vmem_to_hbm [thread:$0]  %s1202, 256, %s1200, %s1172, 128, 128, 8
        $region64: #{tpu_custom_call.1} parent=55 // pred_fallthru
          _
      $region56: #{tpu_custom_call.1} parent=5 // pred_fallthru
        _
      %p1208 = scmp.le.s32.totalorder 2, %s23
      // Predicated region
      $region65: #{tpu_custom_call.1} parent=5 // pred_check
        %p1209 = pneg %p1208
      $region66: #{tpu_custom_call.1} parent=5 // pred_check_branch
        %1211 = sbr.rel (%p1209) target = $region68
      $region67: #{tpu_custom_call.1} parent=5 // pred_region
        %s1212 = ssub.s32 %s23, 2
        // Predicated region
        $region69: #{tpu_custom_call.1} parent=67 // pred_check
          %p1213 = pneg %p251
        $region70: #{tpu_custom_call.1} parent=67 // pred_check_branch
          %1215 = sbr.rel (%p1213) target = $region72
        $region71: #{tpu_custom_call.1} parent=67 // pred_region
          %s1216 = sand.u32 %s236, 1
          %s1217 = scalar_lea.sflag [#allocation3], %s1216
          %s1218 = sand.u32 %s236, 1
          %s1219 = smul.addr %s1218, 16
          %s1220 = scalar_lea.vmem [#allocation2], %s1219
          %1221 = dma.done %s1217, 256
        $region72: #{tpu_custom_call.1} parent=67 // pred_fallthru
          _
        // Predicated region
        $region73: #{tpu_custom_call.1} parent=67 // pred_check
          %p1222 = pneg %p277
        $region74: #{tpu_custom_call.1} parent=67 // pred_check_branch
          %1224 = sbr.rel (%p1222) target = $region76
        $region75: #{tpu_custom_call.1} parent=67 // pred_region
          %s1225 = sand.u32 %s262, 1
          %s1226 = scalar_lea.sflag [#allocation5], %s1225
          %s1227 = sand.u32 %s262, 1
          %s1228 = smul.addr %s1227, 16
          %s1229 = scalar_lea.vmem [#allocation4], %s1228
          %1230 = dma.done %s1226, 256
        $region76: #{tpu_custom_call.1} parent=67 // pred_fallthru
          _
      $region68: #{tpu_custom_call.1} parent=5 // pred_fallthru
        _
    $region6: #{tpu_custom_call.1} parent=1 // loop_footer
      %s27 = sadd.s32 1, %s23
    $region7: #{tpu_custom_call.1} parent=1 // loop_footer_branch
      %22 = sbr.rel target = $region3
    $region8: #{tpu_custom_call.1} parent=1 // loop_exit
      _
    %1231 = vsyncpa [#allocation3], 1
    %s1232 = scalar_lea.sflag [#allocation3], 1
    %1233 = vsyncpa %s1232, 1
    %1234 = vsyncpa [#allocation5], 1
    %s1235 = scalar_lea.sflag [#allocation5], 1
    %1236 = vsyncpa %s1235, 1

</llo_original>
